<compile_context>
chip_gen: v7x
topology: tpu7x:2x2x1
jax: 0.10.0
libtpu: 0.0.40
codegen_flags: <defaults>
</compile_context>

<pallas_src>
import functools

import jax
import jax.numpy as jnp
from jax.experimental import pallas as pl
from jax.experimental.pallas import tpu as pltpu


# ----------------------------------------------------------------------------
# Fused Pallas kernel: log-domain SPD-SRU update + attention head + classifier
# ----------------------------------------------------------------------------
def _sru_heads_kernel(lstate_ref, lx_ref, coef_ref, wh_ref, bh_ref,
                      state_out_ref, heads_out_ref, *, node_number, k):
    """All tensors live fully in VMEM (shapes are tiny, no grid needed).

    lstate_ref : (n2, k)    log-domain SRU state, one column per alpha channel
    lx_ref     : (n2, 1)    logm of the attention-aggregated node feature
    coef_ref   : (5, k)     rows = [w, alpha, (1-alpha)(1-s), (1-alpha)s, v]
    wh_ref     : (n2, N+C)  packed [attention-linear | classify-linear] weights
    bh_ref     : (1,  N+C)  packed biases
    state_out  : (n2, k+1)  columns 0..k-1 = new log-state, column k = log-output
    heads_out  : (1,  N+C)  lanes 0..N-1 = softmaxed attention, N.. = logits
    """
    L = lstate_ref[...]                       # (n2, k)
    Lx = lx_ref[...]                          # (n2, 1)
    coefs = coef_ref[...]                     # (5, k)
    w_mix = coefs[0:1, :]                     # memory-mix weights
    c_self = coefs[1:2, :]                    # alpha                ("keep")
    c_mem = coefs[2:3, :]                     # (1-alpha)(1-s)       (memory summary)
    c_in = coefs[3:4, :]                      # (1-alpha)s           (new observation)
    v_out = coefs[4:5, :]                     # output-mix weights

    # weighted Frechet mean of the memories (log domain): VPU mul + lane reduce
    M = jnp.sum(L * w_mix, axis=1, keepdims=True)             # (n2, 1)
    # per-alpha EMA update blended with the new observation (pure VPU)
    Lnew = c_self * L + c_mem * M + c_in * Lx                 # (n2, k)
    # output = weighted mean of the updated memories (log domain)
    Lout = jnp.sum(Lnew * v_out, axis=1, keepdims=True)       # (n2, 1)

    state_out_ref[:, 0:k] = Lnew
    state_out_ref[:, k:k + 1] = Lout

    # Heads: SPDLogMap(expm(Lout)) == Lout, so consume Lout directly.
    # 1-row GEMV as VPU broadcast-multiply + cross-sublane reduce (no MXU).
    h = jnp.sum(Lout * wh_ref[...], axis=0, keepdims=True) + bh_ref[...]  # (1, N+C)

    # attention head: Linear -> Softmax
    att_logits = h[:, :node_number]
    att_logits = att_logits - jnp.max(att_logits, axis=-1, keepdims=True)
    e = jnp.exp(att_logits)
    att = e * pl.reciprocal(jnp.sum(e, axis=-1, keepdims=True), approx=True)

    heads_out_ref[:, 0:node_number] = att
    heads_out_ref[:, node_number:] = h[:, node_number:]       # raw class logits


def _vmem_spec():
    return pl.BlockSpec(memory_space=pltpu.MemorySpace.VMEM)


def sru_and_heads(log_state, lx, coef, w_heads, b_heads, *, node_number):
    n2, k = log_state.shape
    nc = w_heads.shape[1]
    kernel = functools.partial(_sru_heads_kernel, node_number=node_number, k=k)
    return pl.pallas_call(
        kernel,
        out_shape=(
            jax.ShapeDtypeStruct((n2, k + 1), jnp.float32),    # [new log-state | log-output]
            jax.ShapeDtypeStruct((1, nc), jnp.float32),        # [attention | logits]
        ),
        in_specs=[_vmem_spec()] * 5,
        out_specs=(_vmem_spec(), _vmem_spec()),
    )(log_state, lx, coef, w_heads, b_heads)


# ----------------------------------------------------------------------------
# SPD helpers (eigh-based, plain JAX glue)
# ----------------------------------------------------------------------------
def _sym(x):
    return 0.5 * (x + jnp.swapaxes(x, -1, -2))


def spd_logm(x):
    w, V = jnp.linalg.eigh(_sym(x))
    w = jnp.clip(w, 1e-8, None)
    return (V * jnp.log(w)[..., None, :]) @ jnp.swapaxes(V, -1, -2)


def sym_expm(x):
    w, V = jnp.linalg.eigh(_sym(x))
    return (V * jnp.exp(w)[..., None, :]) @ jnp.swapaxes(V, -1, -2)


# ----------------------------------------------------------------------------
# Jitted per-step math: logm glue + fused Pallas kernel + unpack
# ----------------------------------------------------------------------------
@functools.partial(jax.jit, static_argnames=("node_number",))
def _gam_step(node_feat, log_state, coef, w_heads, b_heads, *, node_number):
    n2, k = log_state.shape
    n = node_feat.shape[-1]
    # TODO(synk): the 4x4 SPD matrix log (eigh) has no clean Pallas equivalent;
    #             it stays in plain JAX, which also blocks fusing the whole
    #             multi-step rollout (and the aggregation) into one pallas_call.
    lx = spd_logm(node_feat).reshape(n2, 1)
    state_slab, heads = sru_and_heads(log_state, lx, coef, w_heads, b_heads,
                                      node_number=node_number)
    new_log_state = state_slab[:, :k]                          # stays in log domain
    lout = state_slab[:, k]
    lstm_output = sym_expm(lout.reshape(n, n))[None]           # (1, n, n) SPD output
    new_attention = heads[0, :node_number]                     # (node_number,)
    logits = heads[:, node_number:]                            # (1, class_number)
    return logits, lstm_output, new_log_state, new_attention


# ----------------------------------------------------------------------------
# GAM module (JAX wrapper around the fused Pallas kernel)
# ----------------------------------------------------------------------------
class Args:
    def __init__(self):
        self.node_number = 16
        self.wavelets_num = 4
        self.class_number = 4
        self.batch_size = 1
        self.alpha = (0.01, 0.25, 0.5, 0.9, 0.99)
        self.node_attention = True
        self.cuda = False


class GAM:
    def __init__(self, args, key):
        self.args = args
        n2 = args.wavelets_num ** 2
        k = len(args.alpha)
        keys = jax.random.split(key, 8)
        scale = 0.1
        # down_block linear: n2 -> node_number
        watt = scale * jax.random.normal(keys[0], (n2, args.node_number), jnp.float32)
        batt = scale * jax.random.normal(keys[1], (1, args.node_number), jnp.float32)
        # classify linear: n2 -> class_number
        wcls = scale * jax.random.normal(keys[2], (n2, args.class_number), jnp.float32)
        bcls = scale * jax.random.normal(keys[3], (1, args.class_number), jnp.float32)
        # Packed head slabs -> a single weight / bias input for the fused kernel.
        self.w_heads = jnp.concatenate([watt, wcls], axis=1)    # (n2, N + C)
        self.b_heads = jnp.concatenate([batt, bcls], axis=1)    # (1,  N + C)

        # SPDSRU parameters
        # TODO(synk): exact SPDSRU parameterization is not provided in the
        #             reference code; implemented as a log-Euclidean wFM
        #             recurrent cell with learned mixing / gate / output weights.
        sru_w = jax.nn.softmax(jax.random.normal(keys[4], (k,), jnp.float32)).reshape(1, k)
        sru_v = jax.nn.softmax(jax.random.normal(keys[5], (k,), jnp.float32)).reshape(1, k)
        sru_s = jax.nn.sigmoid(jax.random.normal(keys[6], (), jnp.float32))
        alpha = jnp.asarray(args.alpha, jnp.float32).reshape(1, k)
        # Pre-combine every per-channel scalar into one tiny coefficient table
        # (single side input, no masked scalar loads inside the kernel).
        self.coef = jnp.concatenate(
            [sru_w,                                   # memory-mix weights
             alpha,                                   # EMA "keep" coefficient
             (1.0 - alpha) * (1.0 - sru_s),           # memory-summary coefficient
             (1.0 - alpha) * sru_s,                   # new-observation coefficient
             sru_v],                                  # output-mix weights
            axis=0)                                   # (5, k)
        self.reset_attention()

    # SPD-form state is derived lazily; the recurrence carries the log-state.
    @property
    def state(self):
        a = self.args
        n, k = a.wavelets_num, len(a.alpha)
        mats = self.log_state.T.reshape(k, n, n)
        return sym_expm(mats)[None]                   # (1, k, n, n)

    def reset_attention(self):
        a = self.args
        n, n2, k = a.wavelets_num, a.wavelets_num ** 2, len(a.alpha)
        # state = diag_embed(0.1 * ones(...))  ->  logm = ln(0.1) * I (exact).
        log_init = (jnp.log(jnp.float32(0.1)) *
                    jnp.eye(n, dtype=jnp.float32)).reshape(n2, 1)
        self.log_state = jnp.tile(log_init, (1, k))             # (n2, k)
        self.attention = jnp.ones((a.node_number,), jnp.float32) / a.node_number

    # ---- StepNetworkLayer.forward -------------------------------------------
    def _step_block(self, graph_weights, node, key):
        neighbor_weights = graph_weights[node]                  # (N,), 0 if no edge
        nw = neighbor_weights * self.attention
        p = nw / jnp.sum(nw)
        # TODO(synk): stochastic neighbour sampling (np.random.choice on a
        #             NetworkX graph) stays in host-side JAX random.
        new_node = jax.random.choice(key, self.args.node_number, p=p)
        attention_score = self.attention[new_node]
        return new_node, attention_score

    # ---- GAM.forward ---------------------------------------------------------
    def forward(self, graph_weights, features, node, key):
        a = self.args
        n, n2 = a.wavelets_num, a.wavelets_num ** 2

        new_node, attention_score = self._step_block(graph_weights, node, key)

        if a.node_attention:
            feat_flat = features.reshape(a.node_number, n2)
            node_feat = (self.attention[None, :] @ feat_flat).reshape(n, n)
        else:
            node_feat = features[new_node]

        logits, lstm_output, new_log_state, new_attention = _gam_step(
            node_feat, self.log_state, self.coef, self.w_heads, self.b_heads,
            node_number=a.node_number)

        self.log_state = new_log_state                          # no expm/logm round trip
        if a.node_attention:
            self.attention = new_attention

        return logits, new_node, attention_score, lstm_output


# ----------------------------------------------------------------------------
# Driver
# ----------------------------------------------------------------------------
if __name__ == "__main__":
    args = Args()
    key = jax.random.PRNGKey(0)
    k_param, k_graph, k_feat, k_step1, k_step2 = jax.random.split(key, 5)

    model = GAM(args, k_param)

    # deterministic weighted graph (dense positive adjacency, zero diagonal)
    gw = jax.random.uniform(k_graph, (args.node_number, args.node_number),
                            jnp.float32, 0.1, 1.0)
    gw = 0.5 * (gw + gw.T)
    gw = gw * (1.0 - jnp.eye(args.node_number, dtype=jnp.float32))

    # deterministic SPD features per node: (node_number, n, n)
    A = jax.random.normal(k_feat,
                          (args.node_number, args.wavelets_num, args.wavelets_num),
                          jnp.float32)
    features = (A @ jnp.swapaxes(A, -1, -2)) / args.wavelets_num \
        + 0.1 * jnp.eye(args.wavelets_num, dtype=jnp.float32)

    # two steps to exercise the carried log-domain state
    logits, new_node, attn_score, lstm_out = model.forward(gw, features,
                                                           node=0, key=k_step1)
    logits, new_node, attn_score, lstm_out = model.forward(gw, features,
                                                           node=int(new_node),
                                                           key=k_step2)
    jax.block_until_ready((logits, new_node, attn_score, lstm_out,
                           model.log_state, model.attention))
    spd_state = model.state
    jax.block_until_ready(spd_state)

    assert logits.shape == (1, args.class_number)
    assert lstm_out.shape == (1, args.wavelets_num, args.wavelets_num)
    assert spd_state.shape == (1, len(args.alpha),
                               args.wavelets_num, args.wavelets_num)
    assert model.attention.shape == (args.node_number,)
    print("KERNEL_OK")
</pallas_src>

<mosaic_0001>
module attributes {stable_mosaic.version = 11 : i64} {
  func.func @_sru_heads_kernel(%arg0: memref<16x5xf32, #tpu.memory_space<vmem>>, %arg1: memref<16x1xf32, #tpu.memory_space<vmem>>, %arg2: memref<5x5xf32, #tpu.memory_space<vmem>>, %arg3: memref<16x20xf32, #tpu.memory_space<vmem>>, %arg4: memref<1x20xf32, #tpu.memory_space<vmem>>, %arg5: memref<16x6xf32, #tpu.memory_space<vmem>>, %arg6: memref<1x20xf32, #tpu.memory_space<vmem>>) attributes {dimension_semantics = [], scalar_prefetch = 0 : i64, scratch_operands = 0 : i64, tpu.core_type = #tpu.core_type<tc>} {
    %c0 = arith.constant 0 : index
    %c0_0 = arith.constant 0 : index
    %0 = vector.load %arg0[%c0, %c0_0] : memref<16x5xf32, #tpu.memory_space<vmem>>, vector<16x5xf32>
    %c0_1 = arith.constant 0 : index
    %c0_2 = arith.constant 0 : index
    %1 = vector.load %arg1[%c0_1, %c0_2] : memref<16x1xf32, #tpu.memory_space<vmem>>, vector<16x1xf32>
    %c0_3 = arith.constant 0 : index
    %c0_4 = arith.constant 0 : index
    %2 = vector.load %arg2[%c0_3, %c0_4] : memref<5x5xf32, #tpu.memory_space<vmem>>, vector<5x5xf32>
    %3 = vector.extract_strided_slice %2 {offsets = [0, 0], sizes = [1, 5], strides = [1, 1]} : vector<5x5xf32> to vector<1x5xf32>
    %4 = vector.extract_strided_slice %2 {offsets = [1, 0], sizes = [1, 5], strides = [1, 1]} : vector<5x5xf32> to vector<1x5xf32>
    %5 = vector.extract_strided_slice %2 {offsets = [2, 0], sizes = [1, 5], strides = [1, 1]} : vector<5x5xf32> to vector<1x5xf32>
    %6 = vector.extract_strided_slice %2 {offsets = [3, 0], sizes = [1, 5], strides = [1, 1]} : vector<5x5xf32> to vector<1x5xf32>
    %7 = vector.extract_strided_slice %2 {offsets = [4, 0], sizes = [1, 5], strides = [1, 1]} : vector<5x5xf32> to vector<1x5xf32>
    %8 = vector.broadcast %3 : vector<1x5xf32> to vector<16x5xf32>
    %9 = arith.mulf %0, %8 : vector<16x5xf32>
    %cst = arith.constant dense<0.000000e+00> : vector<16xf32>
    %10 = vector.multi_reduction <add>, %9, %cst [1] : vector<16x5xf32> to vector<16xf32>
    %11 = vector.shape_cast %10 : vector<16xf32> to vector<16x1xf32>
    %12 = vector.broadcast %4 : vector<1x5xf32> to vector<16x5xf32>
    %13 = arith.mulf %12, %0 : vector<16x5xf32>
    %14 = vector.broadcast %5 : vector<1x5xf32> to vector<16x5xf32>
    %15 = vector.broadcast %11 : vector<16x1xf32> to vector<16x5xf32>
    %16 = arith.mulf %14, %15 : vector<16x5xf32>
    %17 = arith.addf %13, %16 : vector<16x5xf32>
    %18 = vector.broadcast %6 : vector<1x5xf32> to vector<16x5xf32>
    %19 = vector.broadcast %1 : vector<16x1xf32> to vector<16x5xf32>
    %20 = arith.mulf %18, %19 : vector<16x5xf32>
    %21 = arith.addf %17, %20 : vector<16x5xf32>
    %22 = vector.broadcast %7 : vector<1x5xf32> to vector<16x5xf32>
    %23 = arith.mulf %21, %22 : vector<16x5xf32>
    %cst_5 = arith.constant dense<0.000000e+00> : vector<16xf32>
    %24 = vector.multi_reduction <add>, %23, %cst_5 [1] : vector<16x5xf32> to vector<16xf32>
    %25 = vector.shape_cast %24 : vector<16xf32> to vector<16x1xf32>
    %c0_6 = arith.constant 0 : index
    %c0_7 = arith.constant 0 : index
    %26 = vector.load %arg5[%c0_6, %c0_7] : memref<16x6xf32, #tpu.memory_space<vmem>>, vector<16x5xf32>
    tpu.vector_store %arg5[%c0_6, %c0_7], %21 {strides = array<i32>} : memref<16x6xf32, #tpu.memory_space<vmem>>, vector<16x5xf32>,
    %c0_8 = arith.constant 0 : index
    %c5 = arith.constant 5 : index
    %27 = vector.load %arg5[%c0_8, %c5] : memref<16x6xf32, #tpu.memory_space<vmem>>, vector<16x1xf32>
    tpu.vector_store %arg5[%c0_8, %c5], %25 {strides = array<i32>} : memref<16x6xf32, #tpu.memory_space<vmem>>, vector<16x1xf32>,
    %c0_9 = arith.constant 0 : index
    %c0_10 = arith.constant 0 : index
    %28 = vector.load %arg3[%c0_9, %c0_10] : memref<16x20xf32, #tpu.memory_space<vmem>>, vector<16x20xf32>
    %29 = vector.broadcast %25 : vector<16x1xf32> to vector<16x20xf32>
    %30 = arith.mulf %29, %28 : vector<16x20xf32>
    %cst_11 = arith.constant dense<0.000000e+00> : vector<20xf32>
    %31 = vector.multi_reduction <add>, %30, %cst_11 [0] : vector<16x20xf32> to vector<20xf32>
    %32 = vector.shape_cast %31 : vector<20xf32> to vector<1x20xf32>
    %c0_12 = arith.constant 0 : index
    %c0_13 = arith.constant 0 : index
    %33 = vector.load %arg4[%c0_12, %c0_13] : memref<1x20xf32, #tpu.memory_space<vmem>>, vector<1x20xf32>
    %34 = arith.addf %32, %33 : vector<1x20xf32>
    %35 = vector.extract_strided_slice %34 {offsets = [0, 0], sizes = [1, 16], strides = [1, 1]} : vector<1x20xf32> to vector<1x16xf32>
    %cst_14 = arith.constant dense<0xFF800000> : vector<1xf32>
    %36 = vector.multi_reduction <maximumf>, %35, %cst_14 [1] : vector<1x16xf32> to vector<1xf32>
    %37 = vector.shape_cast %36 : vector<1xf32> to vector<1x1xf32>
    %38 = vector.broadcast %37 : vector<1x1xf32> to vector<1x16xf32>
    %39 = arith.subf %35, %38 : vector<1x16xf32>
    %40 = math.exp %39 : vector<1x16xf32>
    %cst_15 = arith.constant dense<0.000000e+00> : vector<1xf32>
    %41 = vector.multi_reduction <add>, %40, %cst_15 [1] : vector<1x16xf32> to vector<1xf32>
    %42 = vector.shape_cast %41 : vector<1xf32> to vector<1x1xf32>
    %43 = tpu.reciprocal %42 {approx = true} : vector<1x1xf32> -> vector<1x1xf32>
    %44 = vector.broadcast %43 : vector<1x1xf32> to vector<1x16xf32>
    %45 = arith.mulf %40, %44 : vector<1x16xf32>
    %c0_16 = arith.constant 0 : index
    %c0_17 = arith.constant 0 : index
    %46 = vector.load %arg6[%c0_16, %c0_17] : memref<1x20xf32, #tpu.memory_space<vmem>>, vector<1x16xf32>
    tpu.vector_store %arg6[%c0_16, %c0_17], %45 {strides = array<i32>} : memref<1x20xf32, #tpu.memory_space<vmem>>, vector<1x16xf32>,
    %47 = vector.extract_strided_slice %34 {offsets = [0, 16], sizes = [1, 4], strides = [1, 1]} : vector<1x20xf32> to vector<1x4xf32>
    %c0_18 = arith.constant 0 : index
    %c16 = arith.constant 16 : index
    %48 = vector.load %arg6[%c0_18, %c16] : memref<1x20xf32, #tpu.memory_space<vmem>>, vector<1x4xf32>
    tpu.vector_store %arg6[%c0_18, %c16], %47 {strides = array<i32>} : memref<1x20xf32, #tpu.memory_space<vmem>>, vector<1x4xf32>,
    return
  }
}

</mosaic_0001>

<llo_original>
// kernel: custom-call.3
$region0: #{custom-call.3}
  %s0 = inlined_call_operand.vmem [shape: f32[2,2], index: 0, kind: input, shape index: {}]
  %s1 = inlined_call_operand.vmem [shape: f32[2,2], index: 1, kind: input, shape index: {}]
  %s2 = inlined_call_operand.vmem [shape: f32[2,2], index: 2, kind: input, shape index: {}]
  %s3 = inlined_call_operand.vmem [shape: f32[2,2], index: 3, kind: input, shape index: {}]
  %s4 = inlined_call_operand.vmem [shape: f32[2], index: 4, kind: output, shape index: {0}]
  %s5 = inlined_call_operand.vmem [shape: f32[2], index: 5, kind: output, shape index: {1}]
  %s6 = inlined_call_operand.vmem [shape: f32[2,2], index: 6, kind: output, shape index: {2}]
  %s7 = inlined_call_operand.vmem [shape: f32[2,2], index: 7, kind: output, shape index: {3}]
  %s8 = inlined_call_operand.vmem [shape: f32[2,2], index: 8, kind: output, shape index: {4}]
  %s9 = inlined_call_operand.vmem [shape: f32[2,2], index: 9, kind: output, shape index: {5}]
  %10 = xla_tuple %s4, %s5, %s6, %s7, %s8, %s9
  $region1: #{custom-call.3} parent=0
    #allocation0 [shape = 'u8[4096]{0}', space=vmem, size = 0x1000, scoped, tag = 'operand span for operand 0']
    #allocation1 [shape = 'u8[1024]{0}', space=vmem, size = 0x400, scoped, tag = 'packed  for operand 0']
    #allocation2 [shape = 'u8[4096]{0}', space=vmem, size = 0x1000, scoped, tag = 'operand span for operand 1']
    #allocation3 [shape = 'u8[1024]{0}', space=vmem, size = 0x400, scoped, tag = 'packed  for operand 1']
    #allocation4 [shape = 'u8[4096]{0}', space=vmem, size = 0x1000, scoped, tag = 'operand span for operand 2']
    #allocation5 [shape = 'u8[1024]{0}', space=vmem, size = 0x400, scoped, tag = 'packed  for operand 2']
    #allocation6 [shape = 'u8[4096]{0}', space=vmem, size = 0x1000, scoped, tag = 'operand span for operand 3']
    #allocation7 [shape = 'u8[1024]{0}', space=vmem, size = 0x400, scoped, tag = 'packed  for operand 3']
    #allocation8 [shape = 'u8[4096]{0}', space=vmem, size = 0x1000, scoped, tag = 'operand span for operand 4']
    #allocation9 [shape = 'u8[512]{0}', space=vmem, size = 0x400, scoped, tag = 'packed  for operand 4']
    #allocation10 [shape = 'u8[4096]{0}', space=vmem, size = 0x1000, scoped, tag = 'operand span for operand 5']
    #allocation11 [shape = 'u8[512]{0}', space=vmem, size = 0x400, scoped, tag = 'packed  for operand 5']
    #allocation12 [shape = 'u8[4096]{0}', space=vmem, size = 0x1000, scoped, tag = 'operand span for operand 6']
    #allocation13 [shape = 'u8[1024]{0}', space=vmem, size = 0x400, scoped, tag = 'packed  for operand 6']
    #allocation14 [shape = 'u8[4096]{0}', space=vmem, size = 0x1000, scoped, tag = 'operand span for operand 7']
    #allocation15 [shape = 'u8[1024]{0}', space=vmem, size = 0x400, scoped, tag = 'packed  for operand 7']
    #allocation16 [shape = 'u8[4096]{0}', space=vmem, size = 0x1000, scoped, tag = 'operand span for operand 8']
    #allocation17 [shape = 'u8[1024]{0}', space=vmem, size = 0x400, scoped, tag = 'packed  for operand 8']
    #allocation18 [shape = 'u8[4096]{0}', space=vmem, size = 0x1000, scoped, tag = 'operand span for operand 9']
    #allocation19 [shape = 'u8[1024]{0}', space=vmem, size = 0x400, scoped, tag = 'packed  for operand 9']
    #allocation20 [shape = 'f32[2,2]{1,0}', space=vmem, size = 0x1000, scoped, tag = 'a top-left matrix']
    #allocation21 [shape = 'f32[2,2]{1,0}', space=vmem, size = 0x1000, scoped, tag = 'a top-right matrix']
    #allocation22 [shape = 'f32[2,2]{1,0}', space=vmem, size = 0x1000, scoped, tag = 'a bottom-left matrix']
    #allocation23 [shape = 'f32[2,2]{1,0}', space=vmem, size = 0x1000, scoped, tag = 'a bottom-right matrix']
    %p12 = scmp.gt.s32.totalorder 2, 0
    // Predicated region
    $region2: #{custom-call.3} parent=1 // pred_check
      %p13 = pneg %p12
    $region3: #{custom-call.3} parent=1 // pred_check_branch
      %15 = sbr.rel (%p13) target = $region5
    $region4: #{custom-call.3} parent=1 // pred_region
      %s16 = sshra.s32 2, 3
      %p17 = scmp.gt.s32.totalorder %s16, 0
      // Predicated region
      $region6: #{custom-call.3} parent=4 // pred_check
        %p18 = pneg %p17
      $region7: #{custom-call.3} parent=4 // pred_check_branch
        %20 = sbr.rel (%p18) target = $region9
      $region8: #{custom-call.3} parent=4 // pred_region
        %s21 = ssub.s32 %s16, 1
        %s22 = smul.u32 %s21, 128
        %s23 = sshra.s32 %s22, 4
        %s24 = scalar_lea.vmem %s0, %s23
        %v25 = vld [vmem:[%s0] sm:$0xff]
        // While loop
        $region10: #{custom-call.3} parent=8 // loop_pre_header
          _
        $region11: #{custom-call.3} parent=8 // loop_header
          %s26 = sphi %s0, %s48
          %s27 = sphi [#allocation1], %s49
          %v28 = vphi %v25, %v50
          %s29 = ssub.s32 %s24, 64
          %p30 = scmp.gt.s32.totalorder %s26, %s29
        $region12: #{custom-call.3} parent=8 // loop_header_branch
          %32 = sbr.rel (%p30) target = $region16
        $region13: #{custom-call.3} parent=8 // loop_body
          %33 = vst [vmem:[%s27] sm:$0xff] %v28
          %v34 = vld [vmem:[%s26 + $0x8] sm:$0xff]
          %35 = vst [vmem:[%s27 + $0x8] sm:$0xff] %v34
          %v36 = vld [vmem:[%s26 + $0x10] sm:$0xff]
          %37 = vst [vmem:[%s27 + $0x10] sm:$0xff] %v36
          %v38 = vld [vmem:[%s26 + $0x18] sm:$0xff]
          %39 = vst [vmem:[%s27 + $0x18] sm:$0xff] %v38
          %v40 = vld [vmem:[%s26 + $0x20] sm:$0xff]
          %41 = vst [vmem:[%s27 + $0x20] sm:$0xff] %v40
          %v42 = vld [vmem:[%s26 + $0x28] sm:$0xff]
          %43 = vst [vmem:[%s27 + $0x28] sm:$0xff] %v42
          %v44 = vld [vmem:[%s26 + $0x30] sm:$0xff]
          %45 = vst [vmem:[%s27 + $0x30] sm:$0xff] %v44
          %v46 = vld [vmem:[%s26 + $0x38] sm:$0xff]
          %47 = vst [vmem:[%s27 + $0x38] sm:$0xff] %v46
        $region14: #{custom-call.3} parent=8 // loop_footer
          %s48 = scalar_lea.vmem %s26, 64
          %s49 = scalar_lea.vmem %s27, 64
          %v50 = vld [vmem:[%s26 + $0x40] sm:$0xff]
        $region15: #{custom-call.3} parent=8 // loop_footer_branch
          %51 = sbr.rel target = $region11
        $region16: #{custom-call.3} parent=8 // loop_exit
          _
        // While loop
        $region17: #{custom-call.3} parent=8 // loop_pre_header
          _
        $region18: #{custom-call.3} parent=8 // loop_header
          %s52 = sphi %s26, %s60
          %s53 = sphi %s27, %s61
          %v54 = vphi %v28, %v54
          %p55 = scmp.gt.s32.totalorder %s52, %s24
        $region19: #{custom-call.3} parent=8 // loop_header_branch
          %57 = sbr.rel (%p55) target = $region23
        $region20: #{custom-call.3} parent=8 // loop_body
          %v58 = vld [vmem:[%s52] sm:$0xff]
          %59 = vst [vmem:[%s53] sm:$0xff] %v58
        $region21: #{custom-call.3} parent=8 // loop_footer
          %s60 = scalar_lea.vmem %s52, 8
          %s61 = scalar_lea.vmem %s53, 8
        $region22: #{custom-call.3} parent=8 // loop_footer_branch
          %62 = sbr.rel target = $region18
        $region23: #{custom-call.3} parent=8 // loop_exit
          _
      $region9: #{custom-call.3} parent=4 // pred_fallthru
        _
      %s63 = sand.u32 2, 7
      %s64 = sshllo.u32 0, %s63
      %s65 = smul.u32 %s16, 128
      %s66 = sshra.s32 %s65, 4
      %s67 = scalar_lea.vmem [#allocation1], %s66
      %s68 = smul.u32 %s16, 128
      %s69 = sshra.s32 %s68, 4
      %s70 = scalar_lea.vmem %s0, %s69
      %v71 = vld [vmem:[%s70] sm:%s64]
      %72 = vst [vmem:[%s67] sm:%s64] %v71
    $region5: #{custom-call.3} parent=1 // pred_fallthru
      _
    %p74 = scmp.gt.s32.totalorder 2, 0
    // Predicated region
    $region24: #{custom-call.3} parent=1 // pred_check
      %p75 = pneg %p74
    $region25: #{custom-call.3} parent=1 // pred_check_branch
      %77 = sbr.rel (%p75) target = $region27
    $region26: #{custom-call.3} parent=1 // pred_region
      %s78 = sshra.s32 2, 3
      %p79 = scmp.gt.s32.totalorder %s78, 0
      // Predicated region
      $region28: #{custom-call.3} parent=26 // pred_check
        %p80 = pneg %p79
      $region29: #{custom-call.3} parent=26 // pred_check_branch
        %82 = sbr.rel (%p80) target = $region31
      $region30: #{custom-call.3} parent=26 // pred_region
        %s83 = ssub.s32 %s78, 1
        %s84 = smul.u32 %s83, 128
        %s85 = sshra.s32 %s84, 4
        %s86 = scalar_lea.vmem %s1, %s85
        %v87 = vld [vmem:[%s1] sm:$0xff]
        // While loop
        $region32: #{custom-call.3} parent=30 // loop_pre_header
          _
        $region33: #{custom-call.3} parent=30 // loop_header
          %s88 = sphi %s1, %s110
          %s89 = sphi [#allocation3], %s111
          %v90 = vphi %v87, %v112
          %s91 = ssub.s32 %s86, 64
          %p92 = scmp.gt.s32.totalorder %s88, %s91
        $region34: #{custom-call.3} parent=30 // loop_header_branch
          %94 = sbr.rel (%p92) target = $region38
        $region35: #{custom-call.3} parent=30 // loop_body
          %95 = vst [vmem:[%s89] sm:$0xff] %v90
          %v96 = vld [vmem:[%s88 + $0x8] sm:$0xff]
          %97 = vst [vmem:[%s89 + $0x8] sm:$0xff] %v96
          %v98 = vld [vmem:[%s88 + $0x10] sm:$0xff]
          %99 = vst [vmem:[%s89 + $0x10] sm:$0xff] %v98
          %v100 = vld [vmem:[%s88 + $0x18] sm:$0xff]
          %101 = vst [vmem:[%s89 + $0x18] sm:$0xff] %v100
          %v102 = vld [vmem:[%s88 + $0x20] sm:$0xff]
          %103 = vst [vmem:[%s89 + $0x20] sm:$0xff] %v102
          %v104 = vld [vmem:[%s88 + $0x28] sm:$0xff]
          %105 = vst [vmem:[%s89 + $0x28] sm:$0xff] %v104
          %v106 = vld [vmem:[%s88 + $0x30] sm:$0xff]
          %107 = vst [vmem:[%s89 + $0x30] sm:$0xff] %v106
          %v108 = vld [vmem:[%s88 + $0x38] sm:$0xff]
          %109 = vst [vmem:[%s89 + $0x38] sm:$0xff] %v108
        $region36: #{custom-call.3} parent=30 // loop_footer
          %s110 = scalar_lea.vmem %s88, 64
          %s111 = scalar_lea.vmem %s89, 64
          %v112 = vld [vmem:[%s88 + $0x40] sm:$0xff]
        $region37: #{custom-call.3} parent=30 // loop_footer_branch
          %113 = sbr.rel target = $region33
        $region38: #{custom-call.3} parent=30 // loop_exit
          _
        // While loop
        $region39: #{custom-call.3} parent=30 // loop_pre_header
          _
        $region40: #{custom-call.3} parent=30 // loop_header
          %s114 = sphi %s88, %s122
          %s115 = sphi %s89, %s123
          %v116 = vphi %v90, %v116
          %p117 = scmp.gt.s32.totalorder %s114, %s86
        $region41: #{custom-call.3} parent=30 // loop_header_branch
          %119 = sbr.rel (%p117) target = $region45
        $region42: #{custom-call.3} parent=30 // loop_body
          %v120 = vld [vmem:[%s114] sm:$0xff]
          %121 = vst [vmem:[%s115] sm:$0xff] %v120
        $region43: #{custom-call.3} parent=30 // loop_footer
          %s122 = scalar_lea.vmem %s114, 8
          %s123 = scalar_lea.vmem %s115, 8
        $region44: #{custom-call.3} parent=30 // loop_footer_branch
          %124 = sbr.rel target = $region40
        $region45: #{custom-call.3} parent=30 // loop_exit
          _
      $region31: #{custom-call.3} parent=26 // pred_fallthru
        _
      %s125 = sand.u32 2, 7
      %s126 = sshllo.u32 0, %s125
      %s127 = smul.u32 %s78, 128
      %s128 = sshra.s32 %s127, 4
      %s129 = scalar_lea.vmem [#allocation3], %s128
      %s130 = smul.u32 %s78, 128
      %s131 = sshra.s32 %s130, 4
      %s132 = scalar_lea.vmem %s1, %s131
      %v133 = vld [vmem:[%s132] sm:%s126]
      %134 = vst [vmem:[%s129] sm:%s126] %v133
    $region27: #{custom-call.3} parent=1 // pred_fallthru
      _
    %p136 = scmp.gt.s32.totalorder 2, 0
    // Predicated region
    $region46: #{custom-call.3} parent=1 // pred_check
      %p137 = pneg %p136
    $region47: #{custom-call.3} parent=1 // pred_check_branch
      %139 = sbr.rel (%p137) target = $region49
    $region48: #{custom-call.3} parent=1 // pred_region
      %s140 = sshra.s32 2, 3
      %p141 = scmp.gt.s32.totalorder %s140, 0
      // Predicated region
      $region50: #{custom-call.3} parent=48 // pred_check
        %p142 = pneg %p141
      $region51: #{custom-call.3} parent=48 // pred_check_branch
        %144 = sbr.rel (%p142) target = $region53
      $region52: #{custom-call.3} parent=48 // pred_region
        %s145 = ssub.s32 %s140, 1
        %s146 = smul.u32 %s145, 128
        %s147 = sshra.s32 %s146, 4
        %s148 = scalar_lea.vmem %s2, %s147
        %v149 = vld [vmem:[%s2] sm:$0xff]
        // While loop
        $region54: #{custom-call.3} parent=52 // loop_pre_header
          _
        $region55: #{custom-call.3} parent=52 // loop_header
          %s150 = sphi %s2, %s172
          %s151 = sphi [#allocation5], %s173
          %v152 = vphi %v149, %v174
          %s153 = ssub.s32 %s148, 64
          %p154 = scmp.gt.s32.totalorder %s150, %s153
        $region56: #{custom-call.3} parent=52 // loop_header_branch
          %156 = sbr.rel (%p154) target = $region60
        $region57: #{custom-call.3} parent=52 // loop_body
          %157 = vst [vmem:[%s151] sm:$0xff] %v152
          %v158 = vld [vmem:[%s150 + $0x8] sm:$0xff]
          %159 = vst [vmem:[%s151 + $0x8] sm:$0xff] %v158
          %v160 = vld [vmem:[%s150 + $0x10] sm:$0xff]
          %161 = vst [vmem:[%s151 + $0x10] sm:$0xff] %v160
          %v162 = vld [vmem:[%s150 + $0x18] sm:$0xff]
          %163 = vst [vmem:[%s151 + $0x18] sm:$0xff] %v162
          %v164 = vld [vmem:[%s150 + $0x20] sm:$0xff]
          %165 = vst [vmem:[%s151 + $0x20] sm:$0xff] %v164
          %v166 = vld [vmem:[%s150 + $0x28] sm:$0xff]
          %167 = vst [vmem:[%s151 + $0x28] sm:$0xff] %v166
          %v168 = vld [vmem:[%s150 + $0x30] sm:$0xff]
          %169 = vst [vmem:[%s151 + $0x30] sm:$0xff] %v168
          %v170 = vld [vmem:[%s150 + $0x38] sm:$0xff]
          %171 = vst [vmem:[%s151 + $0x38] sm:$0xff] %v170
        $region58: #{custom-call.3} parent=52 // loop_footer
          %s172 = scalar_lea.vmem %s150, 64
          %s173 = scalar_lea.vmem %s151, 64
          %v174 = vld [vmem:[%s150 + $0x40] sm:$0xff]
        $region59: #{custom-call.3} parent=52 // loop_footer_branch
          %175 = sbr.rel target = $region55
        $region60: #{custom-call.3} parent=52 // loop_exit
          _
        // While loop
        $region61: #{custom-call.3} parent=52 // loop_pre_header
          _
        $region62: #{custom-call.3} parent=52 // loop_header
          %s176 = sphi %s150, %s184
          %s177 = sphi %s151, %s185
          %v178 = vphi %v152, %v178
          %p179 = scmp.gt.s32.totalorder %s176, %s148
        $region63: #{custom-call.3} parent=52 // loop_header_branch
          %181 = sbr.rel (%p179) target = $region67
        $region64: #{custom-call.3} parent=52 // loop_body
          %v182 = vld [vmem:[%s176] sm:$0xff]
          %183 = vst [vmem:[%s177] sm:$0xff] %v182
        $region65: #{custom-call.3} parent=52 // loop_footer
          %s184 = scalar_lea.vmem %s176, 8
          %s185 = scalar_lea.vmem %s177, 8
        $region66: #{custom-call.3} parent=52 // loop_footer_branch
          %186 = sbr.rel target = $region62
        $region67: #{custom-call.3} parent=52 // loop_exit
          _
      $region53: #{custom-call.3} parent=48 // pred_fallthru
        _
      %s187 = sand.u32 2, 7
      %s188 = sshllo.u32 0, %s187
      %s189 = smul.u32 %s140, 128
      %s190 = sshra.s32 %s189, 4
      %s191 = scalar_lea.vmem [#allocation5], %s190
      %s192 = smul.u32 %s140, 128
      %s193 = sshra.s32 %s192, 4
      %s194 = scalar_lea.vmem %s2, %s193
      %v195 = vld [vmem:[%s194] sm:%s188]
      %196 = vst [vmem:[%s191] sm:%s188] %v195
    $region49: #{custom-call.3} parent=1 // pred_fallthru
      _
    %p198 = scmp.gt.s32.totalorder 2, 0
    // Predicated region
    $region68: #{custom-call.3} parent=1 // pred_check
      %p199 = pneg %p198
    $region69: #{custom-call.3} parent=1 // pred_check_branch
      %201 = sbr.rel (%p199) target = $region71
    $region70: #{custom-call.3} parent=1 // pred_region
      %s202 = sshra.s32 2, 3
      %p203 = scmp.gt.s32.totalorder %s202, 0
      // Predicated region
      $region72: #{custom-call.3} parent=70 // pred_check
        %p204 = pneg %p203
      $region73: #{custom-call.3} parent=70 // pred_check_branch
        %206 = sbr.rel (%p204) target = $region75
      $region74: #{custom-call.3} parent=70 // pred_region
        %s207 = ssub.s32 %s202, 1
        %s208 = smul.u32 %s207, 128
        %s209 = sshra.s32 %s208, 4
        %s210 = scalar_lea.vmem %s3, %s209
        %v211 = vld [vmem:[%s3] sm:$0xff]
        // While loop
        $region76: #{custom-call.3} parent=74 // loop_pre_header
          _
        $region77: #{custom-call.3} parent=74 // loop_header
          %s212 = sphi %s3, %s234
          %s213 = sphi [#allocation7], %s235
          %v214 = vphi %v211, %v236
          %s215 = ssub.s32 %s210, 64
          %p216 = scmp.gt.s32.totalorder %s212, %s215
        $region78: #{custom-call.3} parent=74 // loop_header_branch
          %218 = sbr.rel (%p216) target = $region82
        $region79: #{custom-call.3} parent=74 // loop_body
          %219 = vst [vmem:[%s213] sm:$0xff] %v214
          %v220 = vld [vmem:[%s212 + $0x8] sm:$0xff]
          %221 = vst [vmem:[%s213 + $0x8] sm:$0xff] %v220
          %v222 = vld [vmem:[%s212 + $0x10] sm:$0xff]
          %223 = vst [vmem:[%s213 + $0x10] sm:$0xff] %v222
          %v224 = vld [vmem:[%s212 + $0x18] sm:$0xff]
          %225 = vst [vmem:[%s213 + $0x18] sm:$0xff] %v224
          %v226 = vld [vmem:[%s212 + $0x20] sm:$0xff]
          %227 = vst [vmem:[%s213 + $0x20] sm:$0xff] %v226
          %v228 = vld [vmem:[%s212 + $0x28] sm:$0xff]
          %229 = vst [vmem:[%s213 + $0x28] sm:$0xff] %v228
          %v230 = vld [vmem:[%s212 + $0x30] sm:$0xff]
          %231 = vst [vmem:[%s213 + $0x30] sm:$0xff] %v230
          %v232 = vld [vmem:[%s212 + $0x38] sm:$0xff]
          %233 = vst [vmem:[%s213 + $0x38] sm:$0xff] %v232
        $region80: #{custom-call.3} parent=74 // loop_footer
          %s234 = scalar_lea.vmem %s212, 64
          %s235 = scalar_lea.vmem %s213, 64
          %v236 = vld [vmem:[%s212 + $0x40] sm:$0xff]
        $region81: #{custom-call.3} parent=74 // loop_footer_branch
          %237 = sbr.rel target = $region77
        $region82: #{custom-call.3} parent=74 // loop_exit
          _
        // While loop
        $region83: #{custom-call.3} parent=74 // loop_pre_header
          _
        $region84: #{custom-call.3} parent=74 // loop_header
          %s238 = sphi %s212, %s246
          %s239 = sphi %s213, %s247
          %v240 = vphi %v214, %v240
          %p241 = scmp.gt.s32.totalorder %s238, %s210
        $region85: #{custom-call.3} parent=74 // loop_header_branch
          %243 = sbr.rel (%p241) target = $region89
        $region86: #{custom-call.3} parent=74 // loop_body
          %v244 = vld [vmem:[%s238] sm:$0xff]
          %245 = vst [vmem:[%s239] sm:$0xff] %v244
        $region87: #{custom-call.3} parent=74 // loop_footer
          %s246 = scalar_lea.vmem %s238, 8
          %s247 = scalar_lea.vmem %s239, 8
        $region88: #{custom-call.3} parent=74 // loop_footer_branch
          %248 = sbr.rel target = $region84
        $region89: #{custom-call.3} parent=74 // loop_exit
          _
      $region75: #{custom-call.3} parent=70 // pred_fallthru
        _
      %s249 = sand.u32 2, 7
      %s250 = sshllo.u32 0, %s249
      %s251 = smul.u32 %s202, 128
      %s252 = sshra.s32 %s251, 4
      %s253 = scalar_lea.vmem [#allocation7], %s252
      %s254 = smul.u32 %s202, 128
      %s255 = sshra.s32 %s254, 4
      %s256 = scalar_lea.vmem %s3, %s255
      %v257 = vld [vmem:[%s256] sm:%s250]
      %258 = vst [vmem:[%s253] sm:%s250] %v257
    $region71: #{custom-call.3} parent=1 // pred_fallthru
      _
    %s260 = sshllo.u32 0, 2
    %v261 = vld [vmem:[#allocation1] sm:%s260]
    %262 = vst [vmem:[#allocation0] sm:%s260] %v261
    %s264 = sshllo.u32 0, 2
    %v265 = vld [vmem:[#allocation3] sm:%s264]
    %266 = vst [vmem:[#allocation2] sm:%s264] %v265
    %s268 = sshllo.u32 0, 2
    %v269 = vld [vmem:[#allocation5] sm:%s268]
    %270 = vst [vmem:[#allocation4] sm:%s268] %v269
    %s272 = sshllo.u32 0, 2
    %v273 = vld [vmem:[#allocation7] sm:%s272]
    %274 = vst [vmem:[#allocation6] sm:%s272] %v273
    %s275 = smov [#allocation20]
    %v276 = vld [vmem:[#allocation0] sm:$0xff]
    %277 = vst [vmem:[%s275] sm:$0xff] %v276
    %s278 = smov [#allocation21]
    %v279 = vld [vmem:[#allocation2] sm:$0xff]
    %280 = vst [vmem:[%s278] sm:$0xff] %v279
    %s281 = smov [#allocation22]
    %v282 = vld [vmem:[#allocation4] sm:$0xff]
    %283 = vst [vmem:[%s281] sm:$0xff] %v282
    %s284 = smov [#allocation23]
    %v285 = vld [vmem:[#allocation6] sm:$0xff]
    %286 = vst [vmem:[%s284] sm:$0xff] %v285
    %287 = vst [vmem:[#allocation12] sm:$0xff] 0.0
    %288 = vst [vmem:[#allocation14] sm:$0xff] 0.0
    %289 = vst [vmem:[#allocation16] sm:$0xff] 0.0
    %290 = vst [vmem:[#allocation18] sm:$0xff] 0.0
    %s291 = smov [#allocation12]
    %v292 = vlaneseq
    %v293 = vand.u32 %v292, 127
    %v294 = vmov %v293
    %v295 = vlaneseq
    %v296 = vshrl.u32 %v295, 7
    %v297 = vmov %v296
    %v298 = vld [vmem:[%s291] sm:$0x3]
    %vm301 = vcmp.eq.s32.totalorder %v297, %v294
    %v302 = vsel %vm301, 1.0, %v298
    %303 = vst [vmem:[%s291] sm:$0x3] %v302
    %s304 = smov [#allocation18]
    %v305 = vlaneseq
    %v306 = vand.u32 %v305, 127
    %v307 = vmov %v306
    %v308 = vlaneseq
    %v309 = vshrl.u32 %v308, 7
    %v310 = vmov %v309
    %v311 = vld [vmem:[%s304] sm:$0x3]
    %vm314 = vcmp.eq.s32.totalorder %v310, %v307
    %v315 = vsel %vm314, 1.0, %v311
    %316 = vst [vmem:[%s304] sm:$0x3] %v315
    // While loop
    $region90: #{custom-call.3} parent=1 // loop_pre_header
      _
    $region91: #{custom-call.3} parent=1 // loop_header
      %s318 = sphi 0, %s860
      %v319 = vlaneseq
      %v320 = vand.u32 %v319, 127
      %v321 = vmov %v320
      %v322 = vlaneseq
      %v323 = vshrl.u32 %v322, 7
      %v324 = vmov %v323
      %s325 = smov [#allocation20]
      %v326 = vlaneseq
      %v327 = vand.u32 %v326, 127
      %vm328 = vcmp.ge.s32.totalorder %v327, 0
      %vm329 = vcmp.lt.s32.totalorder %v327, 2
      %vm330 = vmand %vm328, %vm329
      %v331 = vld [vmem:[%s325] sm:$0x3]
      %v332 = vsel %vm330, %v331, 0.0
      %v333 = vmul.f32 %v332, %v332
      %vm336 = vcmp.eq.s32.totalorder %v324, %v321
      %v337 = vsel %vm336, 0.0, %v333
      %v338 = vlaneseq
      %v339 = vand.u32 %v338, 127
      %v340 = vmov %v339
      %v341 = vlaneseq
      %v342 = vshrl.u32 %v341, 7
      %v343 = vmov %v342
      %s344 = smov [#allocation21]
      %v345 = vlaneseq
      %v346 = vand.u32 %v345, 127
      %vm347 = vcmp.ge.s32.totalorder %v346, 0
      %vm348 = vcmp.lt.s32.totalorder %v346, 2
      %vm349 = vmand %vm347, %vm348
      %v350 = vld [vmem:[%s344] sm:$0x3]
      %v351 = vsel %vm349, %v350, 0.0
      %v352 = vmul.f32 %v351, %v351
      %v353 = vadd.f32 %v337, %v352
      %v354 = vadd.f32 %v333, %v352
      %v355 = vlaneseq
      %v356 = vand.u32 %v355, 127
      %v357 = vmov %v356
      %v358 = vlaneseq
      %v359 = vshrl.u32 %v358, 7
      %v360 = vmov %v359
      %s361 = smov [#allocation22]
      %v362 = vlaneseq
      %v363 = vand.u32 %v362, 127
      %vm364 = vcmp.ge.s32.totalorder %v363, 0
      %vm365 = vcmp.lt.s32.totalorder %v363, 2
      %vm366 = vmand %vm364, %vm365
      %v367 = vld [vmem:[%s361] sm:$0x3]
      %v368 = vsel %vm366, %v367, 0.0
      %v369 = vmul.f32 %v368, %v368
      %v370 = vadd.f32 %v353, %v369
      %v371 = vadd.f32 %v354, %v369
      %v372 = vlaneseq
      %v373 = vand.u32 %v372, 127
      %v374 = vmov %v373
      %v375 = vlaneseq
      %v376 = vshrl.u32 %v375, 7
      %v377 = vmov %v376
      %s378 = smov [#allocation23]
      %v379 = vlaneseq
      %v380 = vand.u32 %v379, 127
      %vm381 = vcmp.ge.s32.totalorder %v380, 0
      %vm382 = vcmp.lt.s32.totalorder %v380, 2
      %vm383 = vmand %vm381, %vm382
      %v384 = vld [vmem:[%s378] sm:$0x3]
      %v385 = vsel %vm383, %v384, 0.0
      %v386 = vmul.f32 %v385, %v385
      %vm389 = vcmp.eq.s32.totalorder %v377, %v374
      %v390 = vsel %vm389, 0.0, %v386
      %v391 = vadd.f32 %v370, %v390
      %v392 = vadd.f32 %v371, %v386
      %393 = vadd.xlane.f32.xlu0 %v392
      %v394 = vpop.xlane.xlu0 %393
      %v395 = vrot.slane %v394, 4
      %v396 = vadd.f32 %v394, %v395
      %v397 = vrot.slane %v396, 2
      %v398 = vadd.f32 %v396, %v397
      %v399 = vrot.slane %v398, 1
      %v400 = vadd.f32 %v398, %v399
      %401 = vadd.xlane.f32.xlu0 %v391
      %v402 = vpop.xlane.xlu0 %401
      %v403 = vrot.slane %v402, 4
      %v404 = vadd.f32 %v402, %v403
      %v405 = vrot.slane %v404, 2
      %v406 = vadd.f32 %v404, %v405
      %v407 = vrot.slane %v406, 1
      %v408 = vadd.f32 %v406, %v407
      %s409 = vtos %v408
      %s410 = vtos %v400
      %s411 = smul.f32 1e-10, %s410
      %p412 = scmp.le.f32.partialorder %s409, %s411
      %p413 = scmp.ge.s32.totalorder %s318, 15
      %p414 = por %p412, %p413
    $region92: #{custom-call.3} parent=1 // loop_header_branch
      %862 = sbr.rel (%p414) target = $region96
    $region93: #{custom-call.3} parent=1 // loop_body
      loop: start=0, step=1, limit=3
      $region97: #{custom-call.3} parent=93 // loop_pre_header
        _
      $region98: #{custom-call.3} parent=93 // loop_header
        %s416 = sphi 0, %s420
        %p417 = scmp.ge.s32.totalorder %s416, 3
      $region99: #{custom-call.3} parent=93 // loop_header_branch
        %419 = sbr.rel (%p417) target = $region103
      $region100: #{custom-call.3} parent=93 // loop_body
        #allocation24 [shape = 'f32[1024]{0}', space=vmem, size = 0x1000, scoped, tag = 'a_tl_diag vmem']
        #allocation25 [shape = 'f32[1024]{0}', space=vmem, size = 0x1000, scoped, tag = 'a_tr_diag vmem']
        #allocation26 [shape = 'f32[1024]{0}', space=vmem, size = 0x1000, scoped, tag = 'a_br_diag vmem']
        #allocation27 [shape = 'f32[1024]{0}', space=vmem, size = 0x1000, scoped, tag = 'rt1 vmem']
        #allocation28 [shape = 'f32[1024]{0}', space=vmem, size = 0x1000, scoped, tag = 'rt2 vmem']
        #allocation29 [shape = 'f32[1024]{0}', space=vmem, size = 0x1000, scoped, tag = 'c vmem']
        #allocation30 [shape = 'f32[1024]{0}', space=vmem, size = 0x1000, scoped, tag = 's vmem']
        #allocation31 [shape = 'f32[4096]{0}', space=vmem, size = 0x4000, scoped, tag = 'c broadcast']
        #allocation32 [shape = 'f32[4096]{0}', space=vmem, size = 0x4000, scoped, tag = 's broadcast']
        %s421 = smov [#allocation20]
        %s422 = smov [#allocation24]
        %v423 = vlaneseq
        %v424 = vand.u32 %v423, 127
        %v425 = vmov %v424
        %v426 = vlaneseq
        %v427 = vshrl.u32 %v426, 7
        %v428 = vmov %v427
        %v429 = vld [vmem:[%s421] sm:$0x3]
        %vm432 = vcmp.eq.s32.totalorder %v428, %v425
        %v433 = vsel %vm432, %v429, 0.0
        %v434 = vrot.slane %v433, 4
        %v435 = vadd.f32 %v433, %v434
        %v436 = vrot.slane %v435, 2
        %v437 = vadd.f32 %v435, %v436
        %v438 = vrot.slane %v437, 1
        %v439 = vadd.f32 %v437, %v438
        %440 = vst [vmem:[%s422] sm:$0x1] %v439
        %s441 = smov [#allocation21]
        %s442 = smov [#allocation25]
        %v443 = vlaneseq
        %v444 = vand.u32 %v443, 127
        %v445 = vmov %v444
        %v446 = vlaneseq
        %v447 = vshrl.u32 %v446, 7
        %v448 = vmov %v447
        %v449 = vld [vmem:[%s441] sm:$0x3]
        %vm452 = vcmp.eq.s32.totalorder %v448, %v445
        %v453 = vsel %vm452, %v449, 0.0
        %v454 = vrot.slane %v453, 4
        %v455 = vadd.f32 %v453, %v454
        %v456 = vrot.slane %v455, 2
        %v457 = vadd.f32 %v455, %v456
        %v458 = vrot.slane %v457, 1
        %v459 = vadd.f32 %v457, %v458
        %460 = vst [vmem:[%s442] sm:$0x1] %v459
        %s461 = smov [#allocation23]
        %s462 = smov [#allocation26]
        %v463 = vlaneseq
        %v464 = vand.u32 %v463, 127
        %v465 = vmov %v464
        %v466 = vlaneseq
        %v467 = vshrl.u32 %v466, 7
        %v468 = vmov %v467
        %v469 = vld [vmem:[%s461] sm:$0x3]
        %vm472 = vcmp.eq.s32.totalorder %v468, %v465
        %v473 = vsel %vm472, %v469, 0.0
        %v474 = vrot.slane %v473, 4
        %v475 = vadd.f32 %v473, %v474
        %v476 = vrot.slane %v475, 2
        %v477 = vadd.f32 %v475, %v476
        %v478 = vrot.slane %v477, 1
        %v479 = vadd.f32 %v477, %v478
        %480 = vst [vmem:[%s462] sm:$0x1] %v479
        %s481 = smov [#allocation29]
        %s482 = smov [#allocation30]
        %s483 = smov [#allocation24]
        %v484 = vld [vmem:[%s483] sm:$0xff]
        %s485 = smov [#allocation25]
        %v486 = vld [vmem:[%s485] sm:$0xff]
        %s487 = smov [#allocation26]
        %v488 = vld [vmem:[%s487] sm:$0xff]
        %v489 = vsub.f32 %v488, %v484
        %v490 = vmul.f32 2.0, %v486
        %v491 = vrcp.pop %v490
        %v492 = vmul.f32 %v489, %v491
        %vm493 = vcmp.ge.f32.partialorder %v492, 0.0
        %v494 = vmul.f32 %v492, %v492
        %v495 = vadd.f32 1.0, %v494
        %v496 = vrsqrt.pop %v495
        %v497 = vmul.f32 %v495, %v496
        %vm498 = vcmp.eq.f32.partialorder %v495, inf
        %v499 = vsel %vm498, %v495, %v497
        %vm500 = vcmp.eq.f32.partialorder %v495, 0.0
        %v501 = vand.u32 %v495, 2147483648
        %v502 = vsel %vm500, %v501, %v499
        %v503 = vxor.u32 %v502, 2147483648
        %v504 = vsel %vm493, %v502, %v503
        %v505 = vadd.f32 %v492, %v504
        %v506 = vrcp.pop %v505
        %v507 = vand.u32 2147483647, %v484
        %v508 = vand.u32 2147483647, %v486
        %v509 = vand.u32 2147483647, %v488
        %v510 = vmin.f32 %v507, %v509
        %v511 = vmul.f32 1.1920929e-08, %v510
        %vm512 = vcmp.le.f32.partialorder %v508, %v511
        %v513 = vsel %vm512, 0.0, %v506
        %v514 = vmul.f32 %v513, %v513
        %v515 = vadd.f32 1.0, %v514
        %v516 = vrsqrt.pop %v515
        %v517 = vmul.f32 %v513, %v516
        %v518 = vmul.f32 %v513, %v486
        %v519 = vsub.f32 %v484, %v518
        %v520 = vmul.f32 %v513, %v486
        %v521 = vadd.f32 %v488, %v520
        %s522 = smov [#allocation27]
        %523 = vst [vmem:[%s522] sm:$0xff] %v519
        %s524 = smov [#allocation28]
        %525 = vst [vmem:[%s524] sm:$0xff] %v521
        %s526 = smov %s481
        %527 = vst [vmem:[%s526] sm:$0xff] %v516
        %s528 = smov %s482
        %529 = vst [vmem:[%s528] sm:$0xff] %v517
        %s530 = smov [#allocation29]
        %v531 = vld [vmem:[%s530] ss:$0 sm:$0xff]
        %v532 = vlaneseq
        %v533 = vand.u32 %v532, 127
        %v534 = vmov %v533
        %v535 = vlaneseq
        %v536 = vshrl.u32 %v535, 7
        %v537 = vmov %v536
        %vm539 = vcmp.eq.s32.totalorder %v537, %v534
        %v540 = vsel %vm539, %v531, 0.0
        %541 = vadd.xlane.f32.xlu0 %v540
        %v542 = vpop.xlane.xlu0 %541
        %s543 = smov [#allocation31]
        %544 = vst [vmem:[%s543] sm:$0xff] %v542
        %s545 = smov [#allocation30]
        %v546 = vld [vmem:[%s545] ss:$0 sm:$0xff]
        %v547 = vlaneseq
        %v548 = vand.u32 %v547, 127
        %v549 = vmov %v548
        %v550 = vlaneseq
        %v551 = vshrl.u32 %v550, 7
        %v552 = vmov %v551
        %vm554 = vcmp.eq.s32.totalorder %v552, %v549
        %v555 = vsel %vm554, %v546, 0.0
        %556 = vadd.xlane.f32.xlu0 %v555
        %v557 = vpop.xlane.xlu0 %556
        %s558 = smov [#allocation32]
        %559 = vst [vmem:[%s558] sm:$0xff] %v557
        %s560 = smov [#allocation31]
        %v561 = vld [vmem:[%s560] sm:$0xff]
        %s562 = smov [#allocation32]
        %v563 = vld [vmem:[%s562] sm:$0xff]
        %s564 = smov [#allocation20]
        %s565 = smov [#allocation21]
        %s566 = smov [#allocation22]
        %s567 = smov [#allocation23]
        %v568 = vld [vmem:[%s564] sm:$0x3]
        %v569 = vld [vmem:[%s565] sm:$0x3]
        %v570 = vld [vmem:[%s566] sm:$0x3]
        %v571 = vld [vmem:[%s567] sm:$0x3]
        %v572 = vmul.f32 %v561, %v568
        %v573 = vmul.f32 %v563, %v570
        %v574 = vsub.f32 %v572, %v573
        %v575 = vmul.f32 %v561, %v569
        %v576 = vmul.f32 %v563, %v571
        %v577 = vsub.f32 %v575, %v576
        %v578 = vmul.f32 %v563, %v568
        %v579 = vmul.f32 %v561, %v570
        %v580 = vadd.f32 %v578, %v579
        %v581 = vmul.f32 %v563, %v569
        %v582 = vmul.f32 %v561, %v571
        %v583 = vadd.f32 %v581, %v582
        %584 = vst [vmem:[%s564] sm:$0x3] %v574
        %585 = vst [vmem:[%s565] sm:$0x3] %v577
        %586 = vst [vmem:[%s566] sm:$0x3] %v580
        %587 = vst [vmem:[%s567] sm:$0x3] %v583
        %s588 = smov [#allocation29]
        %v589 = vld [vmem:[%s588] ss:$0 sm:$0xff]
        %s590 = smov [#allocation30]
        %v591 = vld [vmem:[%s590] ss:$0 sm:$0xff]
        %s592 = smov [#allocation20]
        %s593 = smov [#allocation21]
        %s594 = smov [#allocation22]
        %s595 = smov [#allocation23]
        %v596 = vld [vmem:[%s592] sm:$0x3]
        %v597 = vld [vmem:[%s593] sm:$0x3]
        %v598 = vld [vmem:[%s594] sm:$0x3]
        %v599 = vld [vmem:[%s595] sm:$0x3]
        %v600 = vmul.f32 %v589, %v596
        %v601 = vmul.f32 %v591, %v597
        %v602 = vsub.f32 %v600, %v601
        %v603 = vmul.f32 %v591, %v596
        %v604 = vmul.f32 %v589, %v597
        %v605 = vadd.f32 %v603, %v604
        %v606 = vmul.f32 %v589, %v598
        %v607 = vmul.f32 %v591, %v599
        %v608 = vsub.f32 %v606, %v607
        %v609 = vmul.f32 %v591, %v598
        %v610 = vmul.f32 %v589, %v599
        %v611 = vadd.f32 %v609, %v610
        %612 = vst [vmem:[%s592] sm:$0x3] %v602
        %613 = vst [vmem:[%s593] sm:$0x3] %v605
        %614 = vst [vmem:[%s594] sm:$0x3] %v608
        %615 = vst [vmem:[%s595] sm:$0x3] %v611
        %s616 = smov [#allocation20]
        %s617 = smov [#allocation27]
        %v618 = vlaneseq
        %v619 = vand.u32 %v618, 127
        %v620 = vmov %v619
        %v621 = vlaneseq
        %v622 = vshrl.u32 %v621, 7
        %v623 = vmov %v622
        %v624 = vld [vmem:[%s617] ss:$0 sm:$0xff]
        %v625 = vld [vmem:[%s616] sm:$0x3]
        %vm628 = vcmp.eq.s32.totalorder %v623, %v620
        %v629 = vsel %vm628, %v624, %v625
        %630 = vst [vmem:[%s616] sm:$0x3] %v629
        %s631 = smov [#allocation21]
        %v632 = vlaneseq
        %v633 = vand.u32 %v632, 127
        %v634 = vmov %v633
        %v635 = vlaneseq
        %v636 = vshrl.u32 %v635, 7
        %v637 = vmov %v636
        %v638 = vld [vmem:[%s631] sm:$0x3]
        %vm641 = vcmp.eq.s32.totalorder %v637, %v634
        %v642 = vsel %vm641, 0.0, %v638
        %643 = vst [vmem:[%s631] sm:$0x3] %v642
        %s644 = smov [#allocation22]
        %v645 = vlaneseq
        %v646 = vand.u32 %v645, 127
        %v647 = vmov %v646
        %v648 = vlaneseq
        %v649 = vshrl.u32 %v648, 7
        %v650 = vmov %v649
        %v651 = vld [vmem:[%s644] sm:$0x3]
        %vm654 = vcmp.eq.s32.totalorder %v650, %v647
        %v655 = vsel %vm654, 0.0, %v651
        %656 = vst [vmem:[%s644] sm:$0x3] %v655
        %s657 = smov [#allocation23]
        %s658 = smov [#allocation28]
        %v659 = vlaneseq
        %v660 = vand.u32 %v659, 127
        %v661 = vmov %v660
        %v662 = vlaneseq
        %v663 = vshrl.u32 %v662, 7
        %v664 = vmov %v663
        %v665 = vld [vmem:[%s658] ss:$0 sm:$0xff]
        %v666 = vld [vmem:[%s657] sm:$0x3]
        %vm669 = vcmp.eq.s32.totalorder %v664, %v661
        %v670 = vsel %vm669, %v665, %v666
        %671 = vst [vmem:[%s657] sm:$0x3] %v670
        %s672 = smov [#allocation20]
        %s673 = smov [#allocation21]
        %v674 = vld [vmem:[%s673] sm:$0x3]
        %675 = vrot.lane.b32.xlu0 %v674, 1
        %v676 = vpop.permute.xlu0 %675
        %v677 = vld [vmem:[%s672] sm:$0x3]
        %v678 = vld [vmem:[%s672] sm:$0x3]
        %679 = vrot.lane.b32.xlu0 %v678, 1
        %v680 = vpop.permute.xlu0 %679
        %v681 = vlaneseq
        %v682 = vand.u32 %v681, 127
        %vm683 = vcmp.eq.s32.totalorder %v682, 0
        %v684 = vsel %vm683, %v678, %v680
        %v685 = vlaneseq
        %v686 = vand.u32 %v685, 127
        %vm687 = vcmp.eq.s32.totalorder %v686, 1
        %v688 = vsel %vm687, %v676, %v684
        %v689 = vlaneseq
        %v690 = vand.u32 %v689, 127
        %vm691 = vcmp.ge.s32.totalorder %v690, 0
        %vm692 = vcmp.lt.s32.totalorder %v690, 2
        %vm693 = vmand %vm691, %vm692
        %v694 = vsel %vm693, %v688, 0.0
        %v695 = vld [vmem:[%s673] sm:$0x3]
        %696 = vrot.lane.b32.xlu0 %v695, 127
        %v697 = vpop.permute.xlu0 %696
        %v698 = vlaneseq
        %v699 = vand.u32 %v698, 127
        %vm700 = vcmp.eq.s32.totalorder %v699, 1
        %v701 = vsel %vm700, %v677, %v697
        %702 = vst [vmem:[%s672] sm:$0x3] %v694
        %703 = vst [vmem:[%s673] sm:$0x3] %v701
        %s704 = smov [#allocation22]
        %s705 = smov [#allocation23]
        %v706 = vld [vmem:[%s705] sm:$0x3]
        %707 = vrot.lane.b32.xlu0 %v706, 1
        %v708 = vpop.permute.xlu0 %707
        %v709 = vld [vmem:[%s704] sm:$0x3]
        %v710 = vld [vmem:[%s704] sm:$0x3]
        %711 = vrot.lane.b32.xlu0 %v710, 1
        %v712 = vpop.permute.xlu0 %711
        %v713 = vlaneseq
        %v714 = vand.u32 %v713, 127
        %vm715 = vcmp.eq.s32.totalorder %v714, 0
        %v716 = vsel %vm715, %v710, %v712
        %v717 = vlaneseq
        %v718 = vand.u32 %v717, 127
        %vm719 = vcmp.eq.s32.totalorder %v718, 1
        %v720 = vsel %vm719, %v708, %v716
        %v721 = vlaneseq
        %v722 = vand.u32 %v721, 127
        %vm723 = vcmp.ge.s32.totalorder %v722, 0
        %vm724 = vcmp.lt.s32.totalorder %v722, 2
        %vm725 = vmand %vm723, %vm724
        %v726 = vsel %vm725, %v720, 0.0
        %v727 = vld [vmem:[%s705] sm:$0x3]
        %728 = vrot.lane.b32.xlu0 %v727, 127
        %v729 = vpop.permute.xlu0 %728
        %v730 = vlaneseq
        %v731 = vand.u32 %v730, 127
        %vm732 = vcmp.eq.s32.totalorder %v731, 1
        %v733 = vsel %vm732, %v709, %v729
        %734 = vst [vmem:[%s704] sm:$0x3] %v726
        %735 = vst [vmem:[%s705] sm:$0x3] %v733
        %s736 = smov [#allocation20]
        %s737 = smov [#allocation22]
        %v738 = vld [vmem:[%s736] ss:$0 sm:$0xff]
        %s740 = scalar_lea.vmem %s736, 4294967295
        %v741 = vld [vmem:[%s740] sm:$0x2]
        %v742 = vlaneseq
        %v743 = vshrl.u32 %v742, 7
        %vm744 = vcmp.eq.s32.totalorder %v743, 0
        %v745 = vsel %vm744, %v738, %v741
        %s746 = scalar_lea.vmem %s736, 1
        %v747 = vld [vmem:[%s746] ss:$0 sm:$0xff]
        %748 = vst [vmem:[%s736] sm:$0x3] %v745
        %v749 = vld [vmem:[%s737] ss:$0 sm:$0xff]
        %s750 = scalar_lea.vmem %s736, 1
        %751 = vst [vmem:[%s750] sm:$0x1] %v749
        %s752 = scalar_lea.vmem %s737, 1
        %v753 = vld [vmem:[%s752] sm:$0x1]
        %v754 = vlaneseq
        %v755 = vshrl.u32 %v754, 7
        %vm756 = vcmp.eq.s32.totalorder %v755, 1
        %v757 = vsel %vm756, %v747, %v753
        %v758 = vld [vmem:[%s737] ss:$0 sm:$0xff]
        %759 = vst [vmem:[%s737] sm:$0x3] %v757
        %s760 = smov [#allocation21]
        %s761 = smov [#allocation23]
        %v762 = vld [vmem:[%s760] ss:$0 sm:$0xff]
        %s764 = scalar_lea.vmem %s760, 4294967295
        %v765 = vld [vmem:[%s764] sm:$0x2]
        %v766 = vlaneseq
        %v767 = vshrl.u32 %v766, 7
        %vm768 = vcmp.eq.s32.totalorder %v767, 0
        %v769 = vsel %vm768, %v762, %v765
        %s770 = scalar_lea.vmem %s760, 1
        %v771 = vld [vmem:[%s770] ss:$0 sm:$0xff]
        %772 = vst [vmem:[%s760] sm:$0x3] %v769
        %v773 = vld [vmem:[%s761] ss:$0 sm:$0xff]
        %s774 = scalar_lea.vmem %s760, 1
        %775 = vst [vmem:[%s774] sm:$0x1] %v773
        %s776 = scalar_lea.vmem %s761, 1
        %v777 = vld [vmem:[%s776] sm:$0x1]
        %v778 = vlaneseq
        %v779 = vshrl.u32 %v778, 7
        %vm780 = vcmp.eq.s32.totalorder %v779, 1
        %v781 = vsel %vm780, %v771, %v777
        %v782 = vld [vmem:[%s761] ss:$0 sm:$0xff]
        %783 = vst [vmem:[%s761] sm:$0x3] %v781
        %s784 = smov [#allocation31]
        %v785 = vld [vmem:[%s784] sm:$0xff]
        %s786 = smov [#allocation32]
        %v787 = vld [vmem:[%s786] sm:$0xff]
        %s788 = smov [#allocation12]
        %s789 = smov [#allocation14]
        %s790 = smov [#allocation16]
        %s791 = smov [#allocation18]
        %v792 = vld [vmem:[%s788] sm:$0x3]
        %v793 = vld [vmem:[%s789] sm:$0x3]
        %v794 = vld [vmem:[%s790] sm:$0x3]
        %v795 = vld [vmem:[%s791] sm:$0x3]
        %v796 = vmul.f32 %v785, %v792
        %v797 = vmul.f32 %v787, %v794
        %v798 = vsub.f32 %v796, %v797
        %v799 = vmul.f32 %v785, %v793
        %v800 = vmul.f32 %v787, %v795
        %v801 = vsub.f32 %v799, %v800
        %v802 = vmul.f32 %v787, %v792
        %v803 = vmul.f32 %v785, %v794
        %v804 = vadd.f32 %v802, %v803
        %v805 = vmul.f32 %v787, %v793
        %v806 = vmul.f32 %v785, %v795
        %v807 = vadd.f32 %v805, %v806
        %808 = vst [vmem:[%s788] sm:$0x3] %v798
        %809 = vst [vmem:[%s789] sm:$0x3] %v801
        %810 = vst [vmem:[%s790] sm:$0x3] %v804
        %811 = vst [vmem:[%s791] sm:$0x3] %v807
        %s812 = smov [#allocation12]
        %s813 = smov [#allocation16]
        %v814 = vld [vmem:[%s812] ss:$0 sm:$0xff]
        %s816 = scalar_lea.vmem %s812, 4294967295
        %v817 = vld [vmem:[%s816] sm:$0x2]
        %v818 = vlaneseq
        %v819 = vshrl.u32 %v818, 7
        %vm820 = vcmp.eq.s32.totalorder %v819, 0
        %v821 = vsel %vm820, %v814, %v817
        %s822 = scalar_lea.vmem %s812, 1
        %v823 = vld [vmem:[%s822] ss:$0 sm:$0xff]
        %824 = vst [vmem:[%s812] sm:$0x3] %v821
        %v825 = vld [vmem:[%s813] ss:$0 sm:$0xff]
        %s826 = scalar_lea.vmem %s812, 1
        %827 = vst [vmem:[%s826] sm:$0x1] %v825
        %s828 = scalar_lea.vmem %s813, 1
        %v829 = vld [vmem:[%s828] sm:$0x1]
        %v830 = vlaneseq
        %v831 = vshrl.u32 %v830, 7
        %vm832 = vcmp.eq.s32.totalorder %v831, 1
        %v833 = vsel %vm832, %v823, %v829
        %v834 = vld [vmem:[%s813] ss:$0 sm:$0xff]
        %835 = vst [vmem:[%s813] sm:$0x3] %v833
        %s836 = smov [#allocation14]
        %s837 = smov [#allocation18]
        %v838 = vld [vmem:[%s836] ss:$0 sm:$0xff]
        %s840 = scalar_lea.vmem %s836, 4294967295
        %v841 = vld [vmem:[%s840] sm:$0x2]
        %v842 = vlaneseq
        %v843 = vshrl.u32 %v842, 7
        %vm844 = vcmp.eq.s32.totalorder %v843, 0
        %v845 = vsel %vm844, %v838, %v841
        %s846 = scalar_lea.vmem %s836, 1
        %v847 = vld [vmem:[%s846] ss:$0 sm:$0xff]
        %848 = vst [vmem:[%s836] sm:$0x3] %v845
        %v849 = vld [vmem:[%s837] ss:$0 sm:$0xff]
        %s850 = scalar_lea.vmem %s836, 1
        %851 = vst [vmem:[%s850] sm:$0x1] %v849
        %s852 = scalar_lea.vmem %s837, 1
        %v853 = vld [vmem:[%s852] sm:$0x1]
        %v854 = vlaneseq
        %v855 = vshrl.u32 %v854, 7
        %vm856 = vcmp.eq.s32.totalorder %v855, 1
        %v857 = vsel %vm856, %v847, %v853
        %v858 = vld [vmem:[%s837] ss:$0 sm:$0xff]
        %859 = vst [vmem:[%s837] sm:$0x3] %v857
      $region101: #{custom-call.3} parent=93 // loop_footer
        %s420 = sadd.s32 1, %s416
      $region102: #{custom-call.3} parent=93 // loop_footer_branch
        %415 = sbr.rel target = $region98
      $region103: #{custom-call.3} parent=93 // loop_exit
        _
      %s860 = sadd.s32 %s318, 1
    $region94: #{custom-call.3} parent=1 // loop_footer
      _
    $region95: #{custom-call.3} parent=1 // loop_footer_branch
      %317 = sbr.rel target = $region91
    $region96: #{custom-call.3} parent=1 // loop_exit
      _
    %s863 = smov [#allocation20]
    %s864 = smov [#allocation8]
    %v865 = vlaneseq
    %v866 = vand.u32 %v865, 127
    %v867 = vmov %v866
    %v868 = vlaneseq
    %v869 = vshrl.u32 %v868, 7
    %v870 = vmov %v869
    %v871 = vld [vmem:[%s863] sm:$0x3]
    %vm874 = vcmp.eq.s32.totalorder %v870, %v867
    %v875 = vsel %vm874, %v871, 0.0
    %v876 = vrot.slane %v875, 4
    %v877 = vadd.f32 %v875, %v876
    %v878 = vrot.slane %v877, 2
    %v879 = vadd.f32 %v877, %v878
    %v880 = vrot.slane %v879, 1
    %v881 = vadd.f32 %v879, %v880
    %882 = vst [vmem:[%s864] sm:$0x1] %v881
    %s883 = smov [#allocation23]
    %s884 = smov [#allocation10]
    %v885 = vlaneseq
    %v886 = vand.u32 %v885, 127
    %v887 = vmov %v886
    %v888 = vlaneseq
    %v889 = vshrl.u32 %v888, 7
    %v890 = vmov %v889
    %v891 = vld [vmem:[%s883] sm:$0x3]
    %vm894 = vcmp.eq.s32.totalorder %v890, %v887
    %v895 = vsel %vm894, %v891, 0.0
    %v896 = vrot.slane %v895, 4
    %v897 = vadd.f32 %v895, %v896
    %v898 = vrot.slane %v897, 2
    %v899 = vadd.f32 %v897, %v898
    %v900 = vrot.slane %v899, 1
    %v901 = vadd.f32 %v899, %v900
    %902 = vst [vmem:[%s884] sm:$0x1] %v901
    %s904 = sshllo.u32 0, 1
    %v906 = vld [vmem:[#allocation8] sm:%s904]
    %s907 = sshllo.u32 0, 1
    %908 = vst [vmem:[#allocation9] sm:%s907] %v906
    %s910 = sshllo.u32 0, 1
    %v912 = vld [vmem:[#allocation10] sm:%s910]
    %s913 = sshllo.u32 0, 1
    %914 = vst [vmem:[#allocation11] sm:%s913] %v912
    %s916 = sshllo.u32 0, 2
    %v918 = vld [vmem:[#allocation12] sm:%s916]
    %s919 = sshllo.u32 0, 2
    %920 = vst [vmem:[#allocation13] sm:%s919] %v918
    %s922 = sshllo.u32 0, 2
    %v924 = vld [vmem:[#allocation14] sm:%s922]
    %s925 = sshllo.u32 0, 2
    %926 = vst [vmem:[#allocation15] sm:%s925] %v924
    %s928 = sshllo.u32 0, 2
    %v930 = vld [vmem:[#allocation16] sm:%s928]
    %s931 = sshllo.u32 0, 2
    %932 = vst [vmem:[#allocation17] sm:%s931] %v930
    %s934 = sshllo.u32 0, 2
    %v936 = vld [vmem:[#allocation18] sm:%s934]
    %s937 = sshllo.u32 0, 2
    %938 = vst [vmem:[#allocation19] sm:%s937] %v936
    // Predicated region
    $region104: #{custom-call.3} parent=1 // pred_check
      _
    $region105: #{custom-call.3} parent=1 // pred_check_branch
      %940 = sbr.rel (0) target = $region107
    $region106: #{custom-call.3} parent=1 // pred_region
      %p942 = scmp.gt.s32.totalorder 1, 0
      // Predicated region
      $region108: #{custom-call.3} parent=106 // pred_check
        %p943 = pneg %p942
      $region109: #{custom-call.3} parent=106 // pred_check_branch
        %945 = sbr.rel (%p943) target = $region111
      $region110: #{custom-call.3} parent=106 // pred_region
        %s946 = sshra.s32 1, 3
        %p947 = scmp.gt.s32.totalorder %s946, 0
        // Predicated region
        $region112: #{custom-call.3} parent=110 // pred_check
          %p948 = pneg %p947
        $region113: #{custom-call.3} parent=110 // pred_check_branch
          %950 = sbr.rel (%p948) target = $region115
        $region114: #{custom-call.3} parent=110 // pred_region
          %s951 = ssub.s32 %s946, 1
          %s952 = smul.u32 %s951, 128
          %s953 = sshra.s32 %s952, 4
          %s954 = scalar_lea.vmem [#allocation9], %s953
          %v955 = vld [vmem:[#allocation9] sm:$0xff]
          // While loop
          $region116: #{custom-call.3} parent=114 // loop_pre_header
            _
          $region117: #{custom-call.3} parent=114 // loop_header
            %s956 = sphi [#allocation9], %s978
            %s957 = sphi %s4, %s979
            %v958 = vphi %v955, %v980
            %s959 = ssub.s32 %s954, 64
            %p960 = scmp.gt.s32.totalorder %s956, %s959
          $region118: #{custom-call.3} parent=114 // loop_header_branch
            %962 = sbr.rel (%p960) target = $region122
          $region119: #{custom-call.3} parent=114 // loop_body
            %963 = vst [vmem:[%s957] sm:$0xff] %v958
            %v964 = vld [vmem:[%s956 + $0x8] sm:$0xff]
            %965 = vst [vmem:[%s957 + $0x8] sm:$0xff] %v964
            %v966 = vld [vmem:[%s956 + $0x10] sm:$0xff]
            %967 = vst [vmem:[%s957 + $0x10] sm:$0xff] %v966
            %v968 = vld [vmem:[%s956 + $0x18] sm:$0xff]
            %969 = vst [vmem:[%s957 + $0x18] sm:$0xff] %v968
            %v970 = vld [vmem:[%s956 + $0x20] sm:$0xff]
            %971 = vst [vmem:[%s957 + $0x20] sm:$0xff] %v970
            %v972 = vld [vmem:[%s956 + $0x28] sm:$0xff]
            %973 = vst [vmem:[%s957 + $0x28] sm:$0xff] %v972
            %v974 = vld [vmem:[%s956 + $0x30] sm:$0xff]
            %975 = vst [vmem:[%s957 + $0x30] sm:$0xff] %v974
            %v976 = vld [vmem:[%s956 + $0x38] sm:$0xff]
            %977 = vst [vmem:[%s957 + $0x38] sm:$0xff] %v976
          $region120: #{custom-call.3} parent=114 // loop_footer
            %s978 = scalar_lea.vmem %s956, 64
            %s979 = scalar_lea.vmem %s957, 64
            %v980 = vld [vmem:[%s956 + $0x40] sm:$0xff]
          $region121: #{custom-call.3} parent=114 // loop_footer_branch
            %981 = sbr.rel target = $region117
          $region122: #{custom-call.3} parent=114 // loop_exit
            _
          // While loop
          $region123: #{custom-call.3} parent=114 // loop_pre_header
            _
          $region124: #{custom-call.3} parent=114 // loop_header
            %s982 = sphi %s956, %s990
            %s983 = sphi %s957, %s991
            %v984 = vphi %v958, %v984
            %p985 = scmp.gt.s32.totalorder %s982, %s954
          $region125: #{custom-call.3} parent=114 // loop_header_branch
            %987 = sbr.rel (%p985) target = $region129
          $region126: #{custom-call.3} parent=114 // loop_body
            %v988 = vld [vmem:[%s982] sm:$0xff]
            %989 = vst [vmem:[%s983] sm:$0xff] %v988
          $region127: #{custom-call.3} parent=114 // loop_footer
            %s990 = scalar_lea.vmem %s982, 8
            %s991 = scalar_lea.vmem %s983, 8
          $region128: #{custom-call.3} parent=114 // loop_footer_branch
            %992 = sbr.rel target = $region124
          $region129: #{custom-call.3} parent=114 // loop_exit
            _
        $region115: #{custom-call.3} parent=110 // pred_fallthru
          _
        %s993 = sand.u32 1, 7
        %s994 = sshllo.u32 0, %s993
        %s995 = smul.u32 %s946, 128
        %s996 = sshra.s32 %s995, 4
        %s997 = scalar_lea.vmem %s4, %s996
        %s998 = smul.u32 %s946, 128
        %s999 = sshra.s32 %s998, 4
        %s1000 = scalar_lea.vmem [#allocation9], %s999
        %v1001 = vld [vmem:[%s1000] sm:%s994]
        %1002 = vst [vmem:[%s997] sm:%s994] %v1001
      $region111: #{custom-call.3} parent=106 // pred_fallthru
        _
    $region107: #{custom-call.3} parent=1 // pred_fallthru
      _
    // Predicated region
    $region130: #{custom-call.3} parent=1 // pred_check
      _
    $region131: #{custom-call.3} parent=1 // pred_check_branch
      %1004 = sbr.rel (0) target = $region133
    $region132: #{custom-call.3} parent=1 // pred_region
      %p1006 = scmp.gt.s32.totalorder 1, 0
      // Predicated region
      $region134: #{custom-call.3} parent=132 // pred_check
        %p1007 = pneg %p1006
      $region135: #{custom-call.3} parent=132 // pred_check_branch
        %1009 = sbr.rel (%p1007) target = $region137
      $region136: #{custom-call.3} parent=132 // pred_region
        %s1010 = sshra.s32 1, 3
        %p1011 = scmp.gt.s32.totalorder %s1010, 0
        // Predicated region
        $region138: #{custom-call.3} parent=136 // pred_check
          %p1012 = pneg %p1011
        $region139: #{custom-call.3} parent=136 // pred_check_branch
          %1014 = sbr.rel (%p1012) target = $region141
        $region140: #{custom-call.3} parent=136 // pred_region
          %s1015 = ssub.s32 %s1010, 1
          %s1016 = smul.u32 %s1015, 128
          %s1017 = sshra.s32 %s1016, 4
          %s1018 = scalar_lea.vmem [#allocation11], %s1017
          %v1019 = vld [vmem:[#allocation11] sm:$0xff]
          // While loop
          $region142: #{custom-call.3} parent=140 // loop_pre_header
            _
          $region143: #{custom-call.3} parent=140 // loop_header
            %s1020 = sphi [#allocation11], %s1042
            %s1021 = sphi %s5, %s1043
            %v1022 = vphi %v1019, %v1044
            %s1023 = ssub.s32 %s1018, 64
            %p1024 = scmp.gt.s32.totalorder %s1020, %s1023
          $region144: #{custom-call.3} parent=140 // loop_header_branch
            %1026 = sbr.rel (%p1024) target = $region148
          $region145: #{custom-call.3} parent=140 // loop_body
            %1027 = vst [vmem:[%s1021] sm:$0xff] %v1022
            %v1028 = vld [vmem:[%s1020 + $0x8] sm:$0xff]
            %1029 = vst [vmem:[%s1021 + $0x8] sm:$0xff] %v1028
            %v1030 = vld [vmem:[%s1020 + $0x10] sm:$0xff]
            %1031 = vst [vmem:[%s1021 + $0x10] sm:$0xff] %v1030
            %v1032 = vld [vmem:[%s1020 + $0x18] sm:$0xff]
            %1033 = vst [vmem:[%s1021 + $0x18] sm:$0xff] %v1032
            %v1034 = vld [vmem:[%s1020 + $0x20] sm:$0xff]
            %1035 = vst [vmem:[%s1021 + $0x20] sm:$0xff] %v1034
            %v1036 = vld [vmem:[%s1020 + $0x28] sm:$0xff]
            %1037 = vst [vmem:[%s1021 + $0x28] sm:$0xff] %v1036
            %v1038 = vld [vmem:[%s1020 + $0x30] sm:$0xff]
            %1039 = vst [vmem:[%s1021 + $0x30] sm:$0xff] %v1038
            %v1040 = vld [vmem:[%s1020 + $0x38] sm:$0xff]
            %1041 = vst [vmem:[%s1021 + $0x38] sm:$0xff] %v1040
          $region146: #{custom-call.3} parent=140 // loop_footer
            %s1042 = scalar_lea.vmem %s1020, 64
            %s1043 = scalar_lea.vmem %s1021, 64
            %v1044 = vld [vmem:[%s1020 + $0x40] sm:$0xff]
          $region147: #{custom-call.3} parent=140 // loop_footer_branch
            %1045 = sbr.rel target = $region143
          $region148: #{custom-call.3} parent=140 // loop_exit
            _
          // While loop
          $region149: #{custom-call.3} parent=140 // loop_pre_header
            _
          $region150: #{custom-call.3} parent=140 // loop_header
            %s1046 = sphi %s1020, %s1054
            %s1047 = sphi %s1021, %s1055
            %v1048 = vphi %v1022, %v1048
            %p1049 = scmp.gt.s32.totalorder %s1046, %s1018
          $region151: #{custom-call.3} parent=140 // loop_header_branch
            %1051 = sbr.rel (%p1049) target = $region155
          $region152: #{custom-call.3} parent=140 // loop_body
            %v1052 = vld [vmem:[%s1046] sm:$0xff]
            %1053 = vst [vmem:[%s1047] sm:$0xff] %v1052
          $region153: #{custom-call.3} parent=140 // loop_footer
            %s1054 = scalar_lea.vmem %s1046, 8
            %s1055 = scalar_lea.vmem %s1047, 8
          $region154: #{custom-call.3} parent=140 // loop_footer_branch
            %1056 = sbr.rel target = $region150
          $region155: #{custom-call.3} parent=140 // loop_exit
            _
        $region141: #{custom-call.3} parent=136 // pred_fallthru
          _
        %s1057 = sand.u32 1, 7
        %s1058 = sshllo.u32 0, %s1057
        %s1059 = smul.u32 %s1010, 128
        %s1060 = sshra.s32 %s1059, 4
        %s1061 = scalar_lea.vmem %s5, %s1060
        %s1062 = smul.u32 %s1010, 128
        %s1063 = sshra.s32 %s1062, 4
        %s1064 = scalar_lea.vmem [#allocation11], %s1063
        %v1065 = vld [vmem:[%s1064] sm:%s1058]
        %1066 = vst [vmem:[%s1061] sm:%s1058] %v1065
      $region137: #{custom-call.3} parent=132 // pred_fallthru
        _
    $region133: #{custom-call.3} parent=1 // pred_fallthru
      _
    %p1068 = scmp.gt.s32.totalorder 2, 0
    // Predicated region
    $region156: #{custom-call.3} parent=1 // pred_check
      %p1069 = pneg %p1068
    $region157: #{custom-call.3} parent=1 // pred_check_branch
      %1071 = sbr.rel (%p1069) target = $region159
    $region158: #{custom-call.3} parent=1 // pred_region
      %s1072 = sshra.s32 2, 3
      %p1073 = scmp.gt.s32.totalorder %s1072, 0
      // Predicated region
      $region160: #{custom-call.3} parent=158 // pred_check
        %p1074 = pneg %p1073
      $region161: #{custom-call.3} parent=158 // pred_check_branch
        %1076 = sbr.rel (%p1074) target = $region163
      $region162: #{custom-call.3} parent=158 // pred_region
        %s1077 = ssub.s32 %s1072, 1
        %s1078 = smul.u32 %s1077, 128
        %s1079 = sshra.s32 %s1078, 4
        %s1080 = scalar_lea.vmem [#allocation13], %s1079
        %v1081 = vld [vmem:[#allocation13] sm:$0xff]
        // While loop
        $region164: #{custom-call.3} parent=162 // loop_pre_header
          _
        $region165: #{custom-call.3} parent=162 // loop_header
          %s1082 = sphi [#allocation13], %s1104
          %s1083 = sphi %s6, %s1105
          %v1084 = vphi %v1081, %v1106
          %s1085 = ssub.s32 %s1080, 64
          %p1086 = scmp.gt.s32.totalorder %s1082, %s1085
        $region166: #{custom-call.3} parent=162 // loop_header_branch
          %1088 = sbr.rel (%p1086) target = $region170
        $region167: #{custom-call.3} parent=162 // loop_body
          %1089 = vst [vmem:[%s1083] sm:$0xff] %v1084
          %v1090 = vld [vmem:[%s1082 + $0x8] sm:$0xff]
          %1091 = vst [vmem:[%s1083 + $0x8] sm:$0xff] %v1090
          %v1092 = vld [vmem:[%s1082 + $0x10] sm:$0xff]
          %1093 = vst [vmem:[%s1083 + $0x10] sm:$0xff] %v1092
          %v1094 = vld [vmem:[%s1082 + $0x18] sm:$0xff]
          %1095 = vst [vmem:[%s1083 + $0x18] sm:$0xff] %v1094
          %v1096 = vld [vmem:[%s1082 + $0x20] sm:$0xff]
          %1097 = vst [vmem:[%s1083 + $0x20] sm:$0xff] %v1096
          %v1098 = vld [vmem:[%s1082 + $0x28] sm:$0xff]
          %1099 = vst [vmem:[%s1083 + $0x28] sm:$0xff] %v1098
          %v1100 = vld [vmem:[%s1082 + $0x30] sm:$0xff]
          %1101 = vst [vmem:[%s1083 + $0x30] sm:$0xff] %v1100
          %v1102 = vld [vmem:[%s1082 + $0x38] sm:$0xff]
          %1103 = vst [vmem:[%s1083 + $0x38] sm:$0xff] %v1102
        $region168: #{custom-call.3} parent=162 // loop_footer
          %s1104 = scalar_lea.vmem %s1082, 64
          %s1105 = scalar_lea.vmem %s1083, 64
          %v1106 = vld [vmem:[%s1082 + $0x40] sm:$0xff]
        $region169: #{custom-call.3} parent=162 // loop_footer_branch
          %1107 = sbr.rel target = $region165
        $region170: #{custom-call.3} parent=162 // loop_exit
          _
        // While loop
        $region171: #{custom-call.3} parent=162 // loop_pre_header
          _
        $region172: #{custom-call.3} parent=162 // loop_header
          %s1108 = sphi %s1082, %s1116
          %s1109 = sphi %s1083, %s1117
          %v1110 = vphi %v1084, %v1110
          %p1111 = scmp.gt.s32.totalorder %s1108, %s1080
        $region173: #{custom-call.3} parent=162 // loop_header_branch
          %1113 = sbr.rel (%p1111) target = $region177
        $region174: #{custom-call.3} parent=162 // loop_body
          %v1114 = vld [vmem:[%s1108] sm:$0xff]
          %1115 = vst [vmem:[%s1109] sm:$0xff] %v1114
        $region175: #{custom-call.3} parent=162 // loop_footer
          %s1116 = scalar_lea.vmem %s1108, 8
          %s1117 = scalar_lea.vmem %s1109, 8
        $region176: #{custom-call.3} parent=162 // loop_footer_branch
          %1118 = sbr.rel target = $region172
        $region177: #{custom-call.3} parent=162 // loop_exit
          _
      $region163: #{custom-call.3} parent=158 // pred_fallthru
        _
      %s1119 = sand.u32 2, 7
      %s1120 = sshllo.u32 0, %s1119
      %s1121 = smul.u32 %s1072, 128
      %s1122 = sshra.s32 %s1121, 4
      %s1123 = scalar_lea.vmem %s6, %s1122
      %s1124 = smul.u32 %s1072, 128
      %s1125 = sshra.s32 %s1124, 4
      %s1126 = scalar_lea.vmem [#allocation13], %s1125
      %v1127 = vld [vmem:[%s1126] sm:%s1120]
      %1128 = vst [vmem:[%s1123] sm:%s1120] %v1127
    $region159: #{custom-call.3} parent=1 // pred_fallthru
      _
    %p1130 = scmp.gt.s32.totalorder 2, 0
    // Predicated region
    $region178: #{custom-call.3} parent=1 // pred_check
      %p1131 = pneg %p1130
    $region179: #{custom-call.3} parent=1 // pred_check_branch
      %1133 = sbr.rel (%p1131) target = $region181
    $region180: #{custom-call.3} parent=1 // pred_region
      %s1134 = sshra.s32 2, 3
      %p1135 = scmp.gt.s32.totalorder %s1134, 0
      // Predicated region
      $region182: #{custom-call.3} parent=180 // pred_check
        %p1136 = pneg %p1135
      $region183: #{custom-call.3} parent=180 // pred_check_branch
        %1138 = sbr.rel (%p1136) target = $region185
      $region184: #{custom-call.3} parent=180 // pred_region
        %s1139 = ssub.s32 %s1134, 1
        %s1140 = smul.u32 %s1139, 128
        %s1141 = sshra.s32 %s1140, 4
        %s1142 = scalar_lea.vmem [#allocation15], %s1141
        %v1143 = vld [vmem:[#allocation15] sm:$0xff]
        // While loop
        $region186: #{custom-call.3} parent=184 // loop_pre_header
          _
        $region187: #{custom-call.3} parent=184 // loop_header
          %s1144 = sphi [#allocation15], %s1166
          %s1145 = sphi %s7, %s1167
          %v1146 = vphi %v1143, %v1168
          %s1147 = ssub.s32 %s1142, 64
          %p1148 = scmp.gt.s32.totalorder %s1144, %s1147
        $region188: #{custom-call.3} parent=184 // loop_header_branch
          %1150 = sbr.rel (%p1148) target = $region192
        $region189: #{custom-call.3} parent=184 // loop_body
          %1151 = vst [vmem:[%s1145] sm:$0xff] %v1146
          %v1152 = vld [vmem:[%s1144 + $0x8] sm:$0xff]
          %1153 = vst [vmem:[%s1145 + $0x8] sm:$0xff] %v1152
          %v1154 = vld [vmem:[%s1144 + $0x10] sm:$0xff]
          %1155 = vst [vmem:[%s1145 + $0x10] sm:$0xff] %v1154
          %v1156 = vld [vmem:[%s1144 + $0x18] sm:$0xff]
          %1157 = vst [vmem:[%s1145 + $0x18] sm:$0xff] %v1156
          %v1158 = vld [vmem:[%s1144 + $0x20] sm:$0xff]
          %1159 = vst [vmem:[%s1145 + $0x20] sm:$0xff] %v1158
          %v1160 = vld [vmem:[%s1144 + $0x28] sm:$0xff]
          %1161 = vst [vmem:[%s1145 + $0x28] sm:$0xff] %v1160
          %v1162 = vld [vmem:[%s1144 + $0x30] sm:$0xff]
          %1163 = vst [vmem:[%s1145 + $0x30] sm:$0xff] %v1162
          %v1164 = vld [vmem:[%s1144 + $0x38] sm:$0xff]
          %1165 = vst [vmem:[%s1145 + $0x38] sm:$0xff] %v1164
        $region190: #{custom-call.3} parent=184 // loop_footer
          %s1166 = scalar_lea.vmem %s1144, 64
          %s1167 = scalar_lea.vmem %s1145, 64
          %v1168 = vld [vmem:[%s1144 + $0x40] sm:$0xff]
        $region191: #{custom-call.3} parent=184 // loop_footer_branch
          %1169 = sbr.rel target = $region187
        $region192: #{custom-call.3} parent=184 // loop_exit
          _
        // While loop
        $region193: #{custom-call.3} parent=184 // loop_pre_header
          _
        $region194: #{custom-call.3} parent=184 // loop_header
          %s1170 = sphi %s1144, %s1178
          %s1171 = sphi %s1145, %s1179
          %v1172 = vphi %v1146, %v1172
          %p1173 = scmp.gt.s32.totalorder %s1170, %s1142
        $region195: #{custom-call.3} parent=184 // loop_header_branch
          %1175 = sbr.rel (%p1173) target = $region199
        $region196: #{custom-call.3} parent=184 // loop_body
          %v1176 = vld [vmem:[%s1170] sm:$0xff]
          %1177 = vst [vmem:[%s1171] sm:$0xff] %v1176
        $region197: #{custom-call.3} parent=184 // loop_footer
          %s1178 = scalar_lea.vmem %s1170, 8
          %s1179 = scalar_lea.vmem %s1171, 8
        $region198: #{custom-call.3} parent=184 // loop_footer_branch
          %1180 = sbr.rel target = $region194
        $region199: #{custom-call.3} parent=184 // loop_exit
          _
      $region185: #{custom-call.3} parent=180 // pred_fallthru
        _
      %s1181 = sand.u32 2, 7
      %s1182 = sshllo.u32 0, %s1181
      %s1183 = smul.u32 %s1134, 128
      %s1184 = sshra.s32 %s1183, 4
      %s1185 = scalar_lea.vmem %s7, %s1184
      %s1186 = smul.u32 %s1134, 128
      %s1187 = sshra.s32 %s1186, 4
      %s1188 = scalar_lea.vmem [#allocation15], %s1187
      %v1189 = vld [vmem:[%s1188] sm:%s1182]
      %1190 = vst [vmem:[%s1185] sm:%s1182] %v1189
    $region181: #{custom-call.3} parent=1 // pred_fallthru
      _
    %p1192 = scmp.gt.s32.totalorder 2, 0
    // Predicated region
    $region200: #{custom-call.3} parent=1 // pred_check
      %p1193 = pneg %p1192
    $region201: #{custom-call.3} parent=1 // pred_check_branch
      %1195 = sbr.rel (%p1193) target = $region203
    $region202: #{custom-call.3} parent=1 // pred_region
      %s1196 = sshra.s32 2, 3
      %p1197 = scmp.gt.s32.totalorder %s1196, 0
      // Predicated region
      $region204: #{custom-call.3} parent=202 // pred_check
        %p1198 = pneg %p1197
      $region205: #{custom-call.3} parent=202 // pred_check_branch
        %1200 = sbr.rel (%p1198) target = $region207
      $region206: #{custom-call.3} parent=202 // pred_region
        %s1201 = ssub.s32 %s1196, 1
        %s1202 = smul.u32 %s1201, 128
        %s1203 = sshra.s32 %s1202, 4
        %s1204 = scalar_lea.vmem [#allocation17], %s1203
        %v1205 = vld [vmem:[#allocation17] sm:$0xff]
        // While loop
        $region208: #{custom-call.3} parent=206 // loop_pre_header
          _
        $region209: #{custom-call.3} parent=206 // loop_header
          %s1206 = sphi [#allocation17], %s1228
          %s1207 = sphi %s8, %s1229
          %v1208 = vphi %v1205, %v1230
          %s1209 = ssub.s32 %s1204, 64
          %p1210 = scmp.gt.s32.totalorder %s1206, %s1209
        $region210: #{custom-call.3} parent=206 // loop_header_branch
          %1212 = sbr.rel (%p1210) target = $region214
        $region211: #{custom-call.3} parent=206 // loop_body
          %1213 = vst [vmem:[%s1207] sm:$0xff] %v1208
          %v1214 = vld [vmem:[%s1206 + $0x8] sm:$0xff]
          %1215 = vst [vmem:[%s1207 + $0x8] sm:$0xff] %v1214
          %v1216 = vld [vmem:[%s1206 + $0x10] sm:$0xff]
          %1217 = vst [vmem:[%s1207 + $0x10] sm:$0xff] %v1216
          %v1218 = vld [vmem:[%s1206 + $0x18] sm:$0xff]
          %1219 = vst [vmem:[%s1207 + $0x18] sm:$0xff] %v1218
          %v1220 = vld [vmem:[%s1206 + $0x20] sm:$0xff]
          %1221 = vst [vmem:[%s1207 + $0x20] sm:$0xff] %v1220
          %v1222 = vld [vmem:[%s1206 + $0x28] sm:$0xff]
          %1223 = vst [vmem:[%s1207 + $0x28] sm:$0xff] %v1222
          %v1224 = vld [vmem:[%s1206 + $0x30] sm:$0xff]
          %1225 = vst [vmem:[%s1207 + $0x30] sm:$0xff] %v1224
          %v1226 = vld [vmem:[%s1206 + $0x38] sm:$0xff]
          %1227 = vst [vmem:[%s1207 + $0x38] sm:$0xff] %v1226
        $region212: #{custom-call.3} parent=206 // loop_footer
          %s1228 = scalar_lea.vmem %s1206, 64
          %s1229 = scalar_lea.vmem %s1207, 64
          %v1230 = vld [vmem:[%s1206 + $0x40] sm:$0xff]
        $region213: #{custom-call.3} parent=206 // loop_footer_branch
          %1231 = sbr.rel target = $region209
        $region214: #{custom-call.3} parent=206 // loop_exit
          _
        // While loop
        $region215: #{custom-call.3} parent=206 // loop_pre_header
          _
        $region216: #{custom-call.3} parent=206 // loop_header
          %s1232 = sphi %s1206, %s1240
          %s1233 = sphi %s1207, %s1241
          %v1234 = vphi %v1208, %v1234
          %p1235 = scmp.gt.s32.totalorder %s1232, %s1204
        $region217: #{custom-call.3} parent=206 // loop_header_branch
          %1237 = sbr.rel (%p1235) target = $region221
        $region218: #{custom-call.3} parent=206 // loop_body
          %v1238 = vld [vmem:[%s1232] sm:$0xff]
          %1239 = vst [vmem:[%s1233] sm:$0xff] %v1238
        $region219: #{custom-call.3} parent=206 // loop_footer
          %s1240 = scalar_lea.vmem %s1232, 8
          %s1241 = scalar_lea.vmem %s1233, 8
        $region220: #{custom-call.3} parent=206 // loop_footer_branch
          %1242 = sbr.rel target = $region216
        $region221: #{custom-call.3} parent=206 // loop_exit
          _
      $region207: #{custom-call.3} parent=202 // pred_fallthru
        _
      %s1243 = sand.u32 2, 7
      %s1244 = sshllo.u32 0, %s1243
      %s1245 = smul.u32 %s1196, 128
      %s1246 = sshra.s32 %s1245, 4
      %s1247 = scalar_lea.vmem %s8, %s1246
      %s1248 = smul.u32 %s1196, 128
      %s1249 = sshra.s32 %s1248, 4
      %s1250 = scalar_lea.vmem [#allocation17], %s1249
      %v1251 = vld [vmem:[%s1250] sm:%s1244]
      %1252 = vst [vmem:[%s1247] sm:%s1244] %v1251
    $region203: #{custom-call.3} parent=1 // pred_fallthru
      _
    %p1254 = scmp.gt.s32.totalorder 2, 0
    // Predicated region
    $region222: #{custom-call.3} parent=1 // pred_check
      %p1255 = pneg %p1254
    $region223: #{custom-call.3} parent=1 // pred_check_branch
      %1257 = sbr.rel (%p1255) target = $region225
    $region224: #{custom-call.3} parent=1 // pred_region
      %s1258 = sshra.s32 2, 3
      %p1259 = scmp.gt.s32.totalorder %s1258, 0
      // Predicated region
      $region226: #{custom-call.3} parent=224 // pred_check
        %p1260 = pneg %p1259
      $region227: #{custom-call.3} parent=224 // pred_check_branch
        %1262 = sbr.rel (%p1260) target = $region229
      $region228: #{custom-call.3} parent=224 // pred_region
        %s1263 = ssub.s32 %s1258, 1
        %s1264 = smul.u32 %s1263, 128
        %s1265 = sshra.s32 %s1264, 4
        %s1266 = scalar_lea.vmem [#allocation19], %s1265
        %v1267 = vld [vmem:[#allocation19] sm:$0xff]
        // While loop
        $region230: #{custom-call.3} parent=228 // loop_pre_header
          _
        $region231: #{custom-call.3} parent=228 // loop_header
          %s1268 = sphi [#allocation19], %s1290
          %s1269 = sphi %s9, %s1291
          %v1270 = vphi %v1267, %v1292
          %s1271 = ssub.s32 %s1266, 64
          %p1272 = scmp.gt.s32.totalorder %s1268, %s1271
        $region232: #{custom-call.3} parent=228 // loop_header_branch
          %1274 = sbr.rel (%p1272) target = $region236
        $region233: #{custom-call.3} parent=228 // loop_body
          %1275 = vst [vmem:[%s1269] sm:$0xff] %v1270
          %v1276 = vld [vmem:[%s1268 + $0x8] sm:$0xff]
          %1277 = vst [vmem:[%s1269 + $0x8] sm:$0xff] %v1276
          %v1278 = vld [vmem:[%s1268 + $0x10] sm:$0xff]
          %1279 = vst [vmem:[%s1269 + $0x10] sm:$0xff] %v1278
          %v1280 = vld [vmem:[%s1268 + $0x18] sm:$0xff]
          %1281 = vst [vmem:[%s1269 + $0x18] sm:$0xff] %v1280
          %v1282 = vld [vmem:[%s1268 + $0x20] sm:$0xff]
          %1283 = vst [vmem:[%s1269 + $0x20] sm:$0xff] %v1282
          %v1284 = vld [vmem:[%s1268 + $0x28] sm:$0xff]
          %1285 = vst [vmem:[%s1269 + $0x28] sm:$0xff] %v1284
          %v1286 = vld [vmem:[%s1268 + $0x30] sm:$0xff]
          %1287 = vst [vmem:[%s1269 + $0x30] sm:$0xff] %v1286
          %v1288 = vld [vmem:[%s1268 + $0x38] sm:$0xff]
          %1289 = vst [vmem:[%s1269 + $0x38] sm:$0xff] %v1288
        $region234: #{custom-call.3} parent=228 // loop_footer
          %s1290 = scalar_lea.vmem %s1268, 64
          %s1291 = scalar_lea.vmem %s1269, 64
          %v1292 = vld [vmem:[%s1268 + $0x40] sm:$0xff]
        $region235: #{custom-call.3} parent=228 // loop_footer_branch
          %1293 = sbr.rel target = $region231
        $region236: #{custom-call.3} parent=228 // loop_exit
          _
        // While loop
        $region237: #{custom-call.3} parent=228 // loop_pre_header
          _
        $region238: #{custom-call.3} parent=228 // loop_header
          %s1294 = sphi %s1268, %s1302
          %s1295 = sphi %s1269, %s1303
          %v1296 = vphi %v1270, %v1296
          %p1297 = scmp.gt.s32.totalorder %s1294, %s1266
        $region239: #{custom-call.3} parent=228 // loop_header_branch
          %1299 = sbr.rel (%p1297) target = $region243
        $region240: #{custom-call.3} parent=228 // loop_body
          %v1300 = vld [vmem:[%s1294] sm:$0xff]
          %1301 = vst [vmem:[%s1295] sm:$0xff] %v1300
        $region241: #{custom-call.3} parent=228 // loop_footer
          %s1302 = scalar_lea.vmem %s1294, 8
          %s1303 = scalar_lea.vmem %s1295, 8
        $region242: #{custom-call.3} parent=228 // loop_footer_branch
          %1304 = sbr.rel target = $region238
        $region243: #{custom-call.3} parent=228 // loop_exit
          _
      $region229: #{custom-call.3} parent=224 // pred_fallthru
        _
      %s1305 = sand.u32 2, 7
      %s1306 = sshllo.u32 0, %s1305
      %s1307 = smul.u32 %s1258, 128
      %s1308 = sshra.s32 %s1307, 4
      %s1309 = scalar_lea.vmem %s9, %s1308
      %s1310 = smul.u32 %s1258, 128
      %s1311 = sshra.s32 %s1310, 4
      %s1312 = scalar_lea.vmem [#allocation19], %s1311
      %v1313 = vld [vmem:[%s1312] sm:%s1306]
      %1314 = vst [vmem:[%s1309] sm:%s1306] %v1313
    $region225: #{custom-call.3} parent=1 // pred_fallthru
      _
    // Predicated region
    $region244: #{custom-call.3} parent=1 // pred_check
      _
    $region245: #{custom-call.3} parent=1 // pred_check_branch
      %1316 = sbr.rel (0) target = $region247
    $region246: #{custom-call.3} parent=1 // pred_region
      _
    $region247: #{custom-call.3} parent=1 // pred_fallthru
      _
    // Predicated region
    $region248: #{custom-call.3} parent=1 // pred_check
      _
    $region249: #{custom-call.3} parent=1 // pred_check_branch
      %1318 = sbr.rel (0) target = $region251
    $region250: #{custom-call.3} parent=1 // pred_region
      _
    $region251: #{custom-call.3} parent=1 // pred_fallthru
      _

// kernel: squeeze.2
$region0: #{squeeze.2}
  %s0 = inlined_call_operand.vmem [shape: f32[16], index: 0, kind: input, shape index: {}]
  %s1 = inlined_call_operand.vmem [shape: f32[4,4], index: 1, kind: output, shape index: {}]
  $region1: #{squeeze.2} parent=0
    #allocation0 [shape = 'u8[4096]{0}', space=vmem, size = 0x1000, scoped, tag = 'scoped mem for output reshape']
    #allocation1 [shape = 'u8[4096]{0}', space=vmem, size = 0x1000, scoped, tag = 'scoped mem for input reshape']
    %s3 = sshllo.u32 0, 1
    %v4 = vld [vmem:[%s0] sm:%s3]
    %5 = vst [vmem:[#allocation1] sm:%s3] %v4
    %v6 = vld [vmem:[#allocation1] sm:$0x1]
    %vm7 = vcmask 31744
    %8 = vst.msk [vmem:[#allocation0] sm:$0x1] %vm7, %v6
    %v9 = vld [vmem:[#allocation1] sm:$0x1]
    %10 = vrot.lane.b32.xlu0 %v9, 124
    %v11 = vpop.permute.xlu0 %10
    %vm12 = vcmask 31744
    %s13 = scalar_lea.vmem [#allocation0], 1
    %14 = vst.msk [vmem:[%s13] sm:$0x1] %vm12, %v11
    %v15 = vld [vmem:[#allocation1] sm:$0x1]
    %16 = vrot.lane.b32.xlu0 %v15, 120
    %v17 = vpop.permute.xlu0 %16
    %vm18 = vcmask 31744
    %s19 = scalar_lea.vmem [#allocation0], 2
    %20 = vst.msk [vmem:[%s19] sm:$0x1] %vm18, %v17
    %v21 = vld [vmem:[#allocation1] sm:$0x1]
    %22 = vrot.lane.b32.xlu0 %v21, 116
    %v23 = vpop.permute.xlu0 %22
    %vm24 = vcmask 31744
    %s25 = scalar_lea.vmem [#allocation0], 3
    %26 = vst.msk [vmem:[%s25] sm:$0x1] %vm24, %v23
    %s28 = sshllo.u32 0, 4
    %v30 = vld [vmem:[#allocation0] sm:%s28]
    %s31 = sshllo.u32 0, 4
    %32 = vst [vmem:[%s1] sm:%s31] %v30

// kernel: _gam_step.1
$region0: #{_gam_step.1}
  #allocation0 [shape = 'u32[]', space=smem, size = 0x4, offset = 0x4, fixed_abs, tag = 'smem constant byte address 0x4 - core index']
  #allocation1 [shape = 'u32[144,128]{1,0:T(1,128)}', space=vmem, size = 0x12000, scoped, tag = 'internal scratch']
  %s0 = inlined_call_operand.vmem [shape: f32[16,5], index: 0, kind: input, shape index: {}]
  %s1 = inlined_call_operand.vmem [shape: f32[16,1], index: 1, kind: input, shape index: {}]
  %s2 = inlined_call_operand.vmem [shape: f32[5,5], index: 2, kind: input, shape index: {}]
  %s3 = inlined_call_operand.vmem [shape: f32[16,20], index: 3, kind: input, shape index: {}]
  %s4 = inlined_call_operand.vmem [shape: f32[1,20], index: 4, kind: input, shape index: {}]
  %s5 = inlined_call_operand.vmem [shape: f32[16,6], index: 5, kind: output, shape index: {0}]
  %s6 = inlined_call_operand.vmem [shape: f32[1,20], index: 6, kind: output, shape index: {1}]
  %7 = xla_tuple %s5, %s6
  %s8 = sld [smem:[#allocation0]]
  $region38: #{_gam_step.1} parent=0
    _
  %s10 = ssub.s32 1, %s8
  %s11 = scalar_select 0, %s10, %s8
  // Predicated region
  $region2: #{_gam_step.1} parent=0 // pred_check
    _
  $region3: #{_gam_step.1} parent=0 // pred_check_branch
    %13 = sbr.rel (0) target = $region5
  $region4: #{_gam_step.1} parent=0 // pred_region
    _
  $region5: #{_gam_step.1} parent=0 // pred_fallthru
    _
  // Predicated region
  $region6: #{_gam_step.1} parent=0 // pred_check
    _
  $region7: #{_gam_step.1} parent=0 // pred_check_branch
    %15 = sbr.rel (0) target = $region9
  $region8: #{_gam_step.1} parent=0 // pred_region
    _
  $region9: #{_gam_step.1} parent=0 // pred_fallthru
    _
  // Predicated region
  $region10: #{_gam_step.1} parent=0 // pred_check
    _
  $region11: #{_gam_step.1} parent=0 // pred_check_branch
    %17 = sbr.rel (0) target = $region13
  $region12: #{_gam_step.1} parent=0 // pred_region
    _
  $region13: #{_gam_step.1} parent=0 // pred_fallthru
    _
  // Predicated region
  $region14: #{_gam_step.1} parent=0 // pred_check
    _
  $region15: #{_gam_step.1} parent=0 // pred_check_branch
    %19 = sbr.rel (0) target = $region17
  $region16: #{_gam_step.1} parent=0 // pred_region
    _
  $region17: #{_gam_step.1} parent=0 // pred_fallthru
    _
  // Predicated region
  $region18: #{_gam_step.1} parent=0 // pred_check
    _
  $region19: #{_gam_step.1} parent=0 // pred_check_branch
    %21 = sbr.rel (0) target = $region21
  $region20: #{_gam_step.1} parent=0 // pred_region
    _
  $region21: #{_gam_step.1} parent=0 // pred_fallthru
    _
  %v22 = vld [vmem:[%s0] sm:$0xff]
  %v23 = vld [vmem:[%s0 + $0x8] sm:$0xff]
  %v24 = vld [vmem:[%s1] sm:$0xff]
  %v25 = vld [vmem:[%s1 + $0x8] sm:$0xff]
  %v26 = vld [vmem:[%s2] sm:$0x1f]
  %v27 = vlaneseq
  %v28 = vshrl.u32 %v27, 7
  %v29 = vsub.s32 0, %v28
  %v30 = vrot.slane %v26, %v29
  %v31 = vmul.f32 %v22, %v30
  %v32 = vmul.f32 %v23, %v30
  %vm33 = vcmask 39936
  %v34 = vsel %vm33, %v31, 0.0
  %35 = vadd.xlane.f32.xlu0 %v34
  %v36 = vpop.xlane.xlu0 %35
  %v37 = vsel %vm33, %v32, 0.0
  %38 = vadd.xlane.f32.xlu0 %v37
  %v39 = vpop.xlane.xlu0 %38
  %v40 = vlaneseq
  %v41 = vshrl.u32 %v40, 7
  %v42 = vsub.s32 1, %v41
  %v43 = vrot.slane %v26, %v42
  %v44 = vmul.f32 %v43, %v22
  %v45 = vmul.f32 %v43, %v23
  %v46 = vlaneseq
  %v47 = vshrl.u32 %v46, 7
  %v48 = vsub.s32 2, %v47
  %v49 = vrot.slane %v26, %v48
  %v50 = vmul.f32 %v49, %v36
  %v51 = vmul.f32 %v49, %v39
  %v52 = vadd.f32 %v44, %v50
  %v53 = vadd.f32 %v45, %v51
  %v54 = vlaneseq
  %v55 = vshrl.u32 %v54, 7
  %v56 = vsub.s32 3, %v55
  %v57 = vrot.slane %v26, %v56
  %59 = vset.pattern.permute.xlu0 0
  %60 = vperm.xlu0 %59, %v24
  %v61 = vpop.permute.xlu0 %60
  %64 = vset.pattern.permute.xlu0 0
  %65 = vperm.xlu0 %64, %v25
  %v66 = vpop.permute.xlu0 %65
  %v68 = vmul.f32 %v57, %v61
  %v69 = vmul.f32 %v57, %v66
  %v70 = vadd.f32 %v52, %v68
  %v71 = vadd.f32 %v53, %v69
  %v72 = vlaneseq
  %v73 = vshrl.u32 %v72, 7
  %v74 = vsub.s32 4, %v73
  %v75 = vrot.slane %v26, %v74
  %v76 = vmul.f32 %v70, %v75
  %v77 = vmul.f32 %v71, %v75
  %v78 = vsel %vm33, %v76, 0.0
  %79 = vadd.xlane.f32.xlu0 %v78
  %v80 = vpop.xlane.xlu0 %79
  %v81 = vsel %vm33, %v77, 0.0
  %82 = vadd.xlane.f32.xlu0 %v81
  %v83 = vpop.xlane.xlu0 %82
  %84 = vst.msk [vmem:[%s5] sm:$0xff] %vm33, %v70
  %85 = vst.msk [vmem:[%s5 + $0x8] sm:$0xff] %vm33, %v71
  %vm86 = vcmask 48168
  %87 = vst.msk [vmem:[%s5] sm:$0xff] %vm86, %v80
  %88 = vst.msk [vmem:[%s5 + $0x8] sm:$0xff] %vm86, %v83
  %v89 = vld [vmem:[%s3] sm:$0xff]
  %v90 = vld [vmem:[%s3 + $0x8] sm:$0xff]
  %v91 = vmul.f32 %v80, %v89
  %v92 = vmul.f32 %v83, %v90
  %vm93 = vcmask 162816
  %v94 = vsel %vm93, %v91, 0.0
  %v95 = vsel %vm93, %v92, 0.0
  %v96 = vadd.f32 %v94, %v95
  %v97 = vrot.slane %v96, 4
  %v98 = vadd.f32 %v96, %v97
  %v99 = vrot.slane %v98, 2
  %v100 = vadd.f32 %v98, %v99
  %v101 = vrot.slane %v100, 1
  %v102 = vadd.f32 %v100, %v101
  %v103 = vld [vmem:[%s4] sm:$0x1]
  %v104 = vadd.f32 %v102, %v103
  %vm105 = vcmask 122880
  %v106 = vsel %vm105, %v104, -inf
  %107 = vmax.xlane.f32.xlu0 %v106
  %v108 = vpop.xlane.xlu0 %107
  %v109 = vsub.f32 %v104, %v108
  %v110 = vmul.f32 %v109, 1.442695
  %v111 = vpow.pop %v110
  %v112 = vsel %vm105, %v111, 0.0
  %113 = vadd.xlane.f32.xlu0 %v112
  %v114 = vpop.xlane.xlu0 %113
  %v115 = vrcp.pop %v114
  %v116 = vmul.f32 %v111, %v115
  %117 = vst.msk [vmem:[%s6] sm:$0x1] %vm105, %v116
  %vm118 = vcmask 155776
  %119 = vst.msk [vmem:[%s6] sm:$0x1] %vm118, %v104
  // Predicated region
  $region22: #{_gam_step.1} parent=0 // pred_check
    _
  $region23: #{_gam_step.1} parent=0 // pred_check_branch
    %121 = sbr.rel (0) target = $region25
  $region24: #{_gam_step.1} parent=0 // pred_region
    _
  $region25: #{_gam_step.1} parent=0 // pred_fallthru
    _
  // Predicated region
  $region26: #{_gam_step.1} parent=0 // pred_check
    _
  $region27: #{_gam_step.1} parent=0 // pred_check_branch
    %123 = sbr.rel (0) target = $region29
  $region28: #{_gam_step.1} parent=0 // pred_region
    _
  $region29: #{_gam_step.1} parent=0 // pred_fallthru
    _
  // Predicated region
  $region30: #{_gam_step.1} parent=0 // pred_check
    _
  $region31: #{_gam_step.1} parent=0 // pred_check_branch
    %125 = sbr.rel (0) target = $region33
  $region32: #{_gam_step.1} parent=0 // pred_region
    _
  $region33: #{_gam_step.1} parent=0 // pred_fallthru
    _
  // Predicated region
  $region34: #{_gam_step.1} parent=0 // pred_check
    _
  $region35: #{_gam_step.1} parent=0 // pred_check_branch
    %127 = sbr.rel (0) target = $region37
  $region36: #{_gam_step.1} parent=0 // pred_region
    _
  $region37: #{_gam_step.1} parent=0 // pred_fallthru
    _

</llo_original>
